<compile_context>
chip_gen: v7x
topology: tpu7x:2x2x1
jax: 0.10.0
libtpu: 0.0.40
codegen_flags: <defaults>
</compile_context>

<pallas_src>
import functools
import math

import jax
import jax.numpy as jnp
from jax.experimental import pallas as pl
from jax.experimental.pallas import tpu as pltpu

LOG_STD_MIN = -20.0
LOG_STD_MAX = 2.0
_LOG_STD_SCALE = 0.5 * (LOG_STD_MAX - LOG_STD_MIN)          # 11.0
_LOG_STD_OFFSET = LOG_STD_MIN + _LOG_STD_SCALE              # -9.0
_HALF_LOG_2PI = 0.5 * math.log(2.0 * math.pi)


def _round_up(x, m):
    return ((x + m - 1) // m) * m


def _actor_kernel(h1, out_dim,
                  state_ref, eps_ref,
                  w1c_ref, b1c_ref,
                  w2_ref, b2_ref, w2e_ref, b2e_ref,
                  wh_ref, bh_ref,
                  action_ref, logp_ref, mu_tanh_ref):
    s = state_ref[...]

    # ---- Fused layer 1 (mean + std branches share the input) -------------
    # (bb, in) @ (in, 2*h1)  -> split into x | xe at lane 512 (tile aligned).
    y1 = jnp.dot(s.astype(jnp.bfloat16), w1c_ref[...],
                 preferred_element_type=jnp.float32) + b1c_ref[...]
    y1 = jnp.maximum(y1, 0.0)
    x = y1[:, :h1]
    xe = y1[:, h1:]

    # ---- Layer 2, each branch --------------------------------------------
    x = jnp.dot(x.astype(jnp.bfloat16), w2_ref[...],
                preferred_element_type=jnp.float32) + b2_ref[...]
    x = jnp.maximum(x, 0.0)
    xe = jnp.dot(xe.astype(jnp.bfloat16), w2e_ref[...],
                 preferred_element_type=jnp.float32) + b2e_ref[...]
    xe = jnp.maximum(xe, 0.0)

    # ---- Fused heads: [x | xe] @ block_diag(wmu, wls) ----------------------
    hcat = jnp.concatenate([x, xe], axis=1).astype(jnp.bfloat16)
    heads = jnp.dot(hcat, wh_ref[...],
                    preferred_element_type=jnp.float32) + bh_ref[...]
    mu = heads[:, :out_dim]
    log_std = jnp.tanh(heads[:, out_dim:])
    log_std = _LOG_STD_OFFSET + _LOG_STD_SCALE * log_std
    std = jnp.exp(log_std)

    # ---- rsample + tanh squash --------------------------------------------
    eps = eps_ref[...]
    z = mu + std * eps
    action = jnp.tanh(z)

    # Normal(mu, std).log_prob(z) with (z - mu)/std == eps, minus tanh correction.
    log_prob = (-0.5 * eps * eps - log_std - _HALF_LOG_2PI
                - jnp.log(1.0 - action * action + 1e-7))

    action_ref[...] = action
    logp_ref[...] = jnp.sum(log_prob, axis=-1, keepdims=True)
    mu_tanh_ref[...] = jnp.tanh(mu)


def pack_actor_params(params):
    """Fuse layer-1 / head weights and downcast matmul weights to bf16."""
    w1c = jnp.concatenate([params["w1"], params["w1e"]], axis=1).astype(jnp.bfloat16)
    b1c = jnp.concatenate([params["b1"], params["b1e"]], axis=1)      # f32

    h2, out_dim = params["wmu"].shape
    wh = jnp.zeros((2 * h2, 2 * out_dim), jnp.float32)
    wh = wh.at[:h2, :out_dim].set(params["wmu"])
    wh = wh.at[h2:, out_dim:].set(params["wls"])
    wh = wh.astype(jnp.bfloat16)
    bh = jnp.concatenate([params["bmu"], params["bls"]], axis=1)      # f32

    return dict(
        w1c=w1c, b1c=b1c,
        w2=params["w2"].astype(jnp.bfloat16), b2=params["b2"],
        w2e=params["w2e"].astype(jnp.bfloat16), b2e=params["b2e"],
        wh=wh, bh=bh)


def actor_forward(state, eps, packed, *, block_b=256):
    """Actor forward pass in one Pallas kernel, gridded over the batch."""
    B, in_dim = state.shape
    h1 = packed["w1c"].shape[1] // 2
    h2 = packed["w2"].shape[1]
    out_dim = packed["wh"].shape[1] // 2

    # Batch tile: multiple of 8 sublanes, capped at block_b; weights stay
    # resident in VMEM across grid steps (constant-index BlockSpecs).
    bb = min(block_b, _round_up(B, 8))
    B_pad = _round_up(B, bb)
    if B_pad != B:
        state = jnp.pad(state, ((0, B_pad - B), (0, 0)))
        eps = jnp.pad(eps, ((0, B_pad - B), (0, 0)))
    grid = (B_pad // bb,)

    def row_spec(cols):
        return pl.BlockSpec((bb, cols), lambda i: (i, 0))

    def full_spec(arr):
        return pl.BlockSpec(arr.shape, lambda i: (0, 0))

    weight_bytes = sum(int(packed[k].size) * packed[k].dtype.itemsize
                       for k in ("w1c", "b1c", "w2", "b2", "w2e", "b2e", "wh", "bh"))
    io_bytes = 4 * B_pad * (in_dim + out_dim + out_dim + 1 + out_dim)
    flops = 2 * B_pad * (in_dim * 2 * h1 + 2 * h1 * h2 + 2 * h2 * 2 * out_dim)
    transcendentals = B_pad * out_dim * 5  # tanh(log_std), exp, tanh(z), tanh(mu), log

    kernel = functools.partial(_actor_kernel, h1, out_dim)

    action, logp, mu_tanh = pl.pallas_call(
        kernel,
        out_shape=(
            jax.ShapeDtypeStruct((B_pad, out_dim), jnp.float32),   # action
            jax.ShapeDtypeStruct((B_pad, 1), jnp.float32),         # log_prob
            jax.ShapeDtypeStruct((B_pad, out_dim), jnp.float32),   # mu.tanh()
        ),
        grid=grid,
        in_specs=[
            row_spec(in_dim),                  # state
            row_spec(out_dim),                 # eps
            full_spec(packed["w1c"]), full_spec(packed["b1c"]),
            full_spec(packed["w2"]), full_spec(packed["b2"]),
            full_spec(packed["w2e"]), full_spec(packed["b2e"]),
            full_spec(packed["wh"]), full_spec(packed["bh"]),
        ],
        out_specs=(row_spec(out_dim), row_spec(1), row_spec(out_dim)),
        compiler_params=pltpu.CompilerParams(
            dimension_semantics=("parallel",)),
        cost_estimate=pl.CostEstimate(
            flops=flops,
            transcendentals=transcendentals,
            bytes_accessed=weight_bytes + io_bytes),
    )(state, eps,
      packed["w1c"], packed["b1c"],
      packed["w2"], packed["b2"],
      packed["w2e"], packed["b2e"],
      packed["wh"], packed["bh"])

    return action[:B], logp[:B], mu_tanh[:B]


def init_actor_params(key, in_dim, out_dim, n_layer=(512, 512)):
    """Synthetic init mirroring the PyTorch module's shapes (weights stored (fan_in, fan_out))."""
    h1, h2 = n_layer
    keys = jax.random.split(key, 12)

    def _lin(kw, kb, fan_in, fan_out, bound):
        w = jax.random.uniform(kw, (fan_in, fan_out), jnp.float32, -bound, bound)
        b = jax.random.uniform(kb, (1, fan_out), jnp.float32, -bound, bound)
        return w, b

    w1, b1 = _lin(keys[0], keys[1], in_dim, h1, 1.0 / math.sqrt(in_dim))
    w2, b2 = _lin(keys[2], keys[3], h1, h2, 1.0 / math.sqrt(h1))
    w1e, b1e = _lin(keys[4], keys[5], in_dim, h1, 1.0 / math.sqrt(in_dim))
    w2e, b2e = _lin(keys[6], keys[7], h1, h2, 1.0 / math.sqrt(h1))
    wls, bls = _lin(keys[8], keys[9], h2, out_dim, 0.003)
    wmu, bmu = _lin(keys[10], keys[11], h2, out_dim, 0.003)

    return dict(w1=w1, b1=b1, w2=w2, b2=b2,
                w1e=w1e, b1e=b1e, w2e=w2e, b2e=b2e,
                wmu=wmu, bmu=bmu, wls=wls, bls=bls)


def _actor_reference(state, eps, packed):
    """Pure-JAX reference using the same bf16-rounded matmul operands."""
    def mm(a, w):
        return jnp.dot(a.astype(jnp.bfloat16).astype(jnp.float32),
                       w.astype(jnp.float32))

    h1 = packed["w1c"].shape[1] // 2
    out_dim = packed["wh"].shape[1] // 2

    y1 = jnp.maximum(mm(state, packed["w1c"]) + packed["b1c"], 0.0)
    x, xe = y1[:, :h1], y1[:, h1:]
    x = jnp.maximum(mm(x, packed["w2"]) + packed["b2"], 0.0)
    xe = jnp.maximum(mm(xe, packed["w2e"]) + packed["b2e"], 0.0)
    heads = mm(jnp.concatenate([x, xe], axis=1), packed["wh"]) + packed["bh"]
    mu = heads[:, :out_dim]
    log_std = _LOG_STD_OFFSET + _LOG_STD_SCALE * jnp.tanh(heads[:, out_dim:])
    std = jnp.exp(log_std)
    z = mu + std * eps
    action = jnp.tanh(z)
    log_prob = (-0.5 * eps * eps - log_std - _HALF_LOG_2PI
                - jnp.log(1.0 - action * action + 1e-7))
    return action, jnp.sum(log_prob, axis=-1, keepdims=True), jnp.tanh(mu)


if __name__ == "__main__":
    B, IN_DIM, OUT_DIM = 8, 32, 8
    key = jax.random.PRNGKey(0)
    k_params, k_state, k_eps = jax.random.split(key, 3)

    params = init_actor_params(k_params, IN_DIM, OUT_DIM, n_layer=(512, 512))
    packed = pack_actor_params(params)
    state = jax.random.normal(k_state, (B, IN_DIM), jnp.float32)
    eps = jax.random.normal(k_eps, (B, OUT_DIM), jnp.float32)   # rsample noise

    action, log_prob, mu_tanh = actor_forward(state, eps, packed)
    jax.block_until_ready((action, log_prob, mu_tanh))

    assert action.shape == (B, OUT_DIM)
    assert log_prob.shape == (B, 1)
    assert mu_tanh.shape == (B, OUT_DIM)

    a_ref, lp_ref, mt_ref = _actor_reference(state, eps, packed)
    assert jnp.allclose(action, a_ref, atol=5e-2, rtol=5e-2)
    assert jnp.allclose(log_prob, lp_ref, atol=5e-2, rtol=5e-2)
    assert jnp.allclose(mu_tanh, mt_ref, atol=5e-2, rtol=5e-2)

    print("KERNEL_OK")
</pallas_src>

<mosaic_0001>
module attributes {stable_mosaic.version = 11 : i64} {
  func.func @_actor_kernel(%arg0: i32, %arg1: memref<8x32xf32, #tpu.memory_space<vmem>>, %arg2: memref<8x8xf32, #tpu.memory_space<vmem>>, %arg3: memref<32x1024xbf16, #tpu.memory_space<vmem>>, %arg4: memref<1x1024xf32, #tpu.memory_space<vmem>>, %arg5: memref<512x512xbf16, #tpu.memory_space<vmem>>, %arg6: memref<1x512xf32, #tpu.memory_space<vmem>>, %arg7: memref<512x512xbf16, #tpu.memory_space<vmem>>, %arg8: memref<1x512xf32, #tpu.memory_space<vmem>>, %arg9: memref<1024x16xbf16, #tpu.memory_space<vmem>>, %arg10: memref<1x16xf32, #tpu.memory_space<vmem>>, %arg11: memref<8x8xf32, #tpu.memory_space<vmem>>, %arg12: memref<8x1xf32, #tpu.memory_space<vmem>>, %arg13: memref<8x8xf32, #tpu.memory_space<vmem>>) attributes {dimension_semantics = [#tpu.dimension_semantics<parallel>], iteration_bounds = array<i64: 1>, scalar_prefetch = 0 : i64, scratch_operands = 0 : i64, tpu.core_type = #tpu.core_type<tc>, window_params = [{transform_indices = @transform_0, window_bounds = array<i64: 8, 32>}, {transform_indices = @transform_1, window_bounds = array<i64: 8, 8>}, {pipeline_mode = #tpu.pipeline_mode<synchronous>, transform_indices = @transform_2, window_bounds = array<i64: 32, 1024>}, {pipeline_mode = #tpu.pipeline_mode<synchronous>, transform_indices = @transform_3, window_bounds = array<i64: 1, 1024>}, {pipeline_mode = #tpu.pipeline_mode<synchronous>, transform_indices = @transform_4, window_bounds = array<i64: 512, 512>}, {pipeline_mode = #tpu.pipeline_mode<synchronous>, transform_indices = @transform_5, window_bounds = array<i64: 1, 512>}, {pipeline_mode = #tpu.pipeline_mode<synchronous>, transform_indices = @transform_6, window_bounds = array<i64: 512, 512>}, {pipeline_mode = #tpu.pipeline_mode<synchronous>, transform_indices = @transform_7, window_bounds = array<i64: 1, 512>}, {pipeline_mode = #tpu.pipeline_mode<synchronous>, transform_indices = @transform_8, window_bounds = array<i64: 1024, 16>}, {pipeline_mode = #tpu.pipeline_mode<synchronous>, transform_indices = @transform_9, window_bounds = array<i64: 1, 16>}, {transform_indices = @transform_10, window_bounds = array<i64: 8, 8>}, {transform_indices = @transform_11, window_bounds = array<i64: 8, 1>}, {transform_indices = @transform_12, window_bounds = array<i64: 8, 8>}]} {
    %c0 = arith.constant 0 : index
    %c0_0 = arith.constant 0 : index
    %0 = vector.load %arg1[%c0, %c0_0] : memref<8x32xf32, #tpu.memory_space<vmem>>, vector<8x32xf32>
    %1 = arith.truncf %0 : vector<8x32xf32> to vector<8x32xbf16>
    %c0_1 = arith.constant 0 : index
    %c0_2 = arith.constant 0 : index
    %2 = vector.load %arg3[%c0_1, %c0_2] : memref<32x1024xbf16, #tpu.memory_space<vmem>>, vector<32x1024xbf16>
    %cst = arith.constant dense<0.000000e+00> : vector<8x1024xf32>
    %3 = tpu.matmul %1, %2, %cst {dimension_numbers = #tpu.dot_dimension_numbers<[1], [0], [0], [1], [0, 0, 1, 1], [], []>} : vector<8x32xbf16>, vector<32x1024xbf16>, vector<8x1024xf32> -> vector<8x1024xf32>
    %c0_3 = arith.constant 0 : index
    %c0_4 = arith.constant 0 : index
    %4 = vector.load %arg4[%c0_3, %c0_4] : memref<1x1024xf32, #tpu.memory_space<vmem>>, vector<1x1024xf32>
    %5 = vector.broadcast %4 : vector<1x1024xf32> to vector<8x1024xf32>
    %6 = arith.addf %3, %5 : vector<8x1024xf32>
    %cst_5 = arith.constant 0.000000e+00 : f32
    %7 = vector.broadcast %cst_5 : f32 to vector<8x1024xf32>
    %8 = arith.maximumf %6, %7 : vector<8x1024xf32>
    %9 = vector.extract_strided_slice %8 {offsets = [0, 0], sizes = [8, 512], strides = [1, 1]} : vector<8x1024xf32> to vector<8x512xf32>
    %10 = vector.extract_strided_slice %8 {offsets = [0, 512], sizes = [8, 512], strides = [1, 1]} : vector<8x1024xf32> to vector<8x512xf32>
    %11 = arith.truncf %9 : vector<8x512xf32> to vector<8x512xbf16>
    %c0_6 = arith.constant 0 : index
    %c0_7 = arith.constant 0 : index
    %12 = vector.load %arg5[%c0_6, %c0_7] : memref<512x512xbf16, #tpu.memory_space<vmem>>, vector<512x512xbf16>
    %cst_8 = arith.constant dense<0.000000e+00> : vector<8x512xf32>
    %13 = tpu.matmul %11, %12, %cst_8 {dimension_numbers = #tpu.dot_dimension_numbers<[1], [0], [0], [1], [0, 0, 1, 1], [], []>} : vector<8x512xbf16>, vector<512x512xbf16>, vector<8x512xf32> -> vector<8x512xf32>
    %c0_9 = arith.constant 0 : index
    %c0_10 = arith.constant 0 : index
    %14 = vector.load %arg6[%c0_9, %c0_10] : memref<1x512xf32, #tpu.memory_space<vmem>>, vector<1x512xf32>
    %15 = vector.broadcast %14 : vector<1x512xf32> to vector<8x512xf32>
    %16 = arith.addf %13, %15 : vector<8x512xf32>
    %cst_11 = arith.constant 0.000000e+00 : f32
    %17 = vector.broadcast %cst_11 : f32 to vector<8x512xf32>
    %18 = arith.maximumf %16, %17 : vector<8x512xf32>
    %19 = arith.truncf %10 : vector<8x512xf32> to vector<8x512xbf16>
    %c0_12 = arith.constant 0 : index
    %c0_13 = arith.constant 0 : index
    %20 = vector.load %arg7[%c0_12, %c0_13] : memref<512x512xbf16, #tpu.memory_space<vmem>>, vector<512x512xbf16>
    %cst_14 = arith.constant dense<0.000000e+00> : vector<8x512xf32>
    %21 = tpu.matmul %19, %20, %cst_14 {dimension_numbers = #tpu.dot_dimension_numbers<[1], [0], [0], [1], [0, 0, 1, 1], [], []>} : vector<8x512xbf16>, vector<512x512xbf16>, vector<8x512xf32> -> vector<8x512xf32>
    %c0_15 = arith.constant 0 : index
    %c0_16 = arith.constant 0 : index
    %22 = vector.load %arg8[%c0_15, %c0_16] : memref<1x512xf32, #tpu.memory_space<vmem>>, vector<1x512xf32>
    %23 = vector.broadcast %22 : vector<1x512xf32> to vector<8x512xf32>
    %24 = arith.addf %21, %23 : vector<8x512xf32>
    %cst_17 = arith.constant 0.000000e+00 : f32
    %25 = vector.broadcast %cst_17 : f32 to vector<8x512xf32>
    %26 = arith.maximumf %24, %25 : vector<8x512xf32>
    %27 = tpu.concatenate %18, %26 in 1 : vector<8x512xf32>, vector<8x512xf32> -> vector<8x1024xf32>
    %28 = arith.truncf %27 : vector<8x1024xf32> to vector<8x1024xbf16>
    %c0_18 = arith.constant 0 : index
    %c0_19 = arith.constant 0 : index
    %29 = vector.load %arg9[%c0_18, %c0_19] : memref<1024x16xbf16, #tpu.memory_space<vmem>>, vector<1024x16xbf16>
    %cst_20 = arith.constant dense<0.000000e+00> : vector<8x16xf32>
    %30 = tpu.matmul %28, %29, %cst_20 {dimension_numbers = #tpu.dot_dimension_numbers<[1], [0], [0], [1], [0, 0, 1, 1], [], []>} : vector<8x1024xbf16>, vector<1024x16xbf16>, vector<8x16xf32> -> vector<8x16xf32>
    %c0_21 = arith.constant 0 : index
    %c0_22 = arith.constant 0 : index
    %31 = vector.load %arg10[%c0_21, %c0_22] : memref<1x16xf32, #tpu.memory_space<vmem>>, vector<1x16xf32>
    %32 = vector.broadcast %31 : vector<1x16xf32> to vector<8x16xf32>
    %33 = arith.addf %30, %32 : vector<8x16xf32>
    %34 = vector.extract_strided_slice %33 {offsets = [0, 0], sizes = [8, 8], strides = [1, 1]} : vector<8x16xf32> to vector<8x8xf32>
    %35 = vector.extract_strided_slice %33 {offsets = [0, 8], sizes = [8, 8], strides = [1, 1]} : vector<8x16xf32> to vector<8x8xf32>
    %36 = math.tanh %35 : vector<8x8xf32>
    %cst_23 = arith.constant 1.100000e+01 : f32
    %37 = vector.broadcast %cst_23 : f32 to vector<8x8xf32>
    %38 = arith.mulf %37, %36 : vector<8x8xf32>
    %cst_24 = arith.constant -9.000000e+00 : f32
    %39 = vector.broadcast %cst_24 : f32 to vector<8x8xf32>
    %40 = arith.addf %39, %38 : vector<8x8xf32>
    %41 = math.exp %40 : vector<8x8xf32>
    %c0_25 = arith.constant 0 : index
    %c0_26 = arith.constant 0 : index
    %42 = vector.load %arg2[%c0_25, %c0_26] : memref<8x8xf32, #tpu.memory_space<vmem>>, vector<8x8xf32>
    %43 = arith.mulf %41, %42 : vector<8x8xf32>
    %44 = arith.addf %34, %43 : vector<8x8xf32>
    %45 = math.tanh %44 : vector<8x8xf32>
    %cst_27 = arith.constant -5.000000e-01 : f32
    %46 = vector.broadcast %cst_27 : f32 to vector<8x8xf32>
    %47 = arith.mulf %46, %42 : vector<8x8xf32>
    %48 = arith.mulf %47, %42 : vector<8x8xf32>
    %49 = arith.subf %48, %40 : vector<8x8xf32>
    %cst_28 = arith.constant 0.918938517 : f32
    %50 = vector.broadcast %cst_28 : f32 to vector<8x8xf32>
    %51 = arith.subf %49, %50 : vector<8x8xf32>
    %52 = arith.mulf %45, %45 : vector<8x8xf32>
    %cst_29 = arith.constant 1.000000e+00 : f32
    %53 = vector.broadcast %cst_29 : f32 to vector<8x8xf32>
    %54 = arith.subf %53, %52 : vector<8x8xf32>
    %cst_30 = arith.constant 1.000000e-07 : f32
    %55 = vector.broadcast %cst_30 : f32 to vector<8x8xf32>
    %56 = arith.addf %54, %55 : vector<8x8xf32>
    %57 = math.log %56 : vector<8x8xf32>
    %58 = arith.subf %51, %57 : vector<8x8xf32>
    %c0_31 = arith.constant 0 : index
    %c0_32 = arith.constant 0 : index
    %59 = vector.load %arg11[%c0_31, %c0_32] : memref<8x8xf32, #tpu.memory_space<vmem>>, vector<8x8xf32>
    tpu.vector_store %arg11[%c0_31, %c0_32], %45 {strides = array<i32>} : memref<8x8xf32, #tpu.memory_space<vmem>>, vector<8x8xf32>,
    %cst_33 = arith.constant dense<0.000000e+00> : vector<8xf32>
    %60 = vector.multi_reduction <add>, %58, %cst_33 [1] : vector<8x8xf32> to vector<8xf32>
    %61 = vector.shape_cast %60 : vector<8xf32> to vector<8x1xf32>
    %c0_34 = arith.constant 0 : index
    %c0_35 = arith.constant 0 : index
    %62 = vector.load %arg12[%c0_34, %c0_35] : memref<8x1xf32, #tpu.memory_space<vmem>>, vector<8x1xf32>
    tpu.vector_store %arg12[%c0_34, %c0_35], %61 {strides = array<i32>} : memref<8x1xf32, #tpu.memory_space<vmem>>, vector<8x1xf32>,
    %63 = math.tanh %34 : vector<8x8xf32>
    %c0_36 = arith.constant 0 : index
    %c0_37 = arith.constant 0 : index
    %64 = vector.load %arg13[%c0_36, %c0_37] : memref<8x8xf32, #tpu.memory_space<vmem>>, vector<8x8xf32>
    tpu.vector_store %arg13[%c0_36, %c0_37], %63 {strides = array<i32>} : memref<8x8xf32, #tpu.memory_space<vmem>>, vector<8x8xf32>,
    return
  }
  func.func @transform_0(%arg0: i32) -> (i32, i32) {
    %c0_i32 = arith.constant 0 : i32
    %c0_i32_0 = arith.constant 0 : i32
    return %arg0, %c0_i32 : i32, i32
  }
  func.func @transform_1(%arg0: i32) -> (i32, i32) {
    %c0_i32 = arith.constant 0 : i32
    %c0_i32_0 = arith.constant 0 : i32
    return %arg0, %c0_i32 : i32, i32
  }
  func.func @transform_2(%arg0: i32) -> (i32, i32) {
    %c0_i32 = arith.constant 0 : i32
    %c0_i32_0 = arith.constant 0 : i32
    %c0_i32_1 = arith.constant 0 : i32
    return %c0_i32, %c0_i32_0 : i32, i32
  }
  func.func @transform_3(%arg0: i32) -> (i32, i32) {
    %c0_i32 = arith.constant 0 : i32
    %c0_i32_0 = arith.constant 0 : i32
    %c0_i32_1 = arith.constant 0 : i32
    return %c0_i32, %c0_i32_0 : i32, i32
  }
  func.func @transform_4(%arg0: i32) -> (i32, i32) {
    %c0_i32 = arith.constant 0 : i32
    %c0_i32_0 = arith.constant 0 : i32
    %c0_i32_1 = arith.constant 0 : i32
    return %c0_i32, %c0_i32_0 : i32, i32
  }
  func.func @transform_5(%arg0: i32) -> (i32, i32) {
    %c0_i32 = arith.constant 0 : i32
    %c0_i32_0 = arith.constant 0 : i32
    %c0_i32_1 = arith.constant 0 : i32
    return %c0_i32, %c0_i32_0 : i32, i32
  }
  func.func @transform_6(%arg0: i32) -> (i32, i32) {
    %c0_i32 = arith.constant 0 : i32
    %c0_i32_0 = arith.constant 0 : i32
    %c0_i32_1 = arith.constant 0 : i32
    return %c0_i32, %c0_i32_0 : i32, i32
  }
  func.func @transform_7(%arg0: i32) -> (i32, i32) {
    %c0_i32 = arith.constant 0 : i32
    %c0_i32_0 = arith.constant 0 : i32
    %c0_i32_1 = arith.constant 0 : i32
    return %c0_i32, %c0_i32_0 : i32, i32
  }
  func.func @transform_8(%arg0: i32) -> (i32, i32) {
    %c0_i32 = arith.constant 0 : i32
    %c0_i32_0 = arith.constant 0 : i32
    %c0_i32_1 = arith.constant 0 : i32
    return %c0_i32, %c0_i32_0 : i32, i32
  }
  func.func @transform_9(%arg0: i32) -> (i32, i32) {
    %c0_i32 = arith.constant 0 : i32
    %c0_i32_0 = arith.constant 0 : i32
    %c0_i32_1 = arith.constant 0 : i32
    return %c0_i32, %c0_i32_0 : i32, i32
  }
  func.func @transform_10(%arg0: i32) -> (i32, i32) {
    %c0_i32 = arith.constant 0 : i32
    %c0_i32_0 = arith.constant 0 : i32
    return %arg0, %c0_i32 : i32, i32
  }
  func.func @transform_11(%arg0: i32) -> (i32, i32) {
    %c0_i32 = arith.constant 0 : i32
    %c0_i32_0 = arith.constant 0 : i32
    return %arg0, %c0_i32 : i32, i32
  }
  func.func @transform_12(%arg0: i32) -> (i32, i32) {
    %c0_i32 = arith.constant 0 : i32
    %c0_i32_0 = arith.constant 0 : i32
    return %arg0, %c0_i32 : i32, i32
  }
}

</mosaic_0001>

<llo_original>
// kernel: tpu_custom_call.1
$region0: #{tpu_custom_call.1}
  #allocation0 [shape = 'u32[]', space=smem, size = 0x4, offset = 0x4, fixed_abs, tag = 'smem constant byte address 0x4 - core index']
  #allocation1 [shape = 'u32[144,128]{1,0:T(1,128)}', space=vmem, size = 0x12000, scoped, tag = 'internal scratch']
  %s0 = inlined_call_operand.vmem [shape: f32[8,32], index: 0, kind: input, shape index: {}]
  %s1 = inlined_call_operand.vmem [shape: f32[8,8], index: 1, kind: input, shape index: {}]
  %s2 = inlined_call_operand.vmem [shape: bf16[32,1024], index: 2, kind: input, shape index: {}]
  %s3 = inlined_call_operand.vmem [shape: f32[1,1024], index: 3, kind: input, shape index: {}]
  %s4 = inlined_call_operand.hbm [shape: bf16[512,512], index: 4, kind: input, shape index: {}]
  %s5 = inlined_call_operand.vmem [shape: f32[1,512], index: 5, kind: input, shape index: {}]
  %s6 = inlined_call_operand.hbm [shape: bf16[512,512], index: 6, kind: input, shape index: {}]
  %s7 = inlined_call_operand.vmem [shape: f32[1,512], index: 7, kind: input, shape index: {}]
  %s8 = inlined_call_operand.vmem [shape: bf16[1024,16], index: 8, kind: input, shape index: {}]
  %s9 = inlined_call_operand.vmem [shape: f32[1,16], index: 9, kind: input, shape index: {}]
  %s10 = inlined_call_operand.hbm [shape: f32[8,8], index: 10, kind: output, shape index: {0}]
  %s11 = inlined_call_operand.vmem [shape: f32[8,1], index: 11, kind: output, shape index: {1}]
  %s12 = inlined_call_operand.hbm [shape: f32[8,8], index: 12, kind: output, shape index: {2}]
  %13 = xla_tuple %s10, %s11, %s12
  %s14 = sld [smem:[#allocation0]]
  $region74: #{tpu_custom_call.1} parent=0
    _
  %s16 = ssub.s32 1, %s14
  %s17 = scalar_select 0, %s16, %s14
  $region1: #{tpu_custom_call.1} parent=0
    #allocation2 [shape = 'u8[524288]{0}', space=vmem, size = 0x80000, scoped, tag = 'input window, operand 4, single buffered']
    #allocation3 [shape = 's32[1]{0}', space=sflag, size = 0x4, scoped, tag = 'scoped memory for tpu_custom_call.1']
    #allocation4 [shape = 's32[1]{0}', space=sflag, size = 0x4, scoped, tag = 'scoped memory for tpu_custom_call.1']
    #allocation5 [shape = 'u8[524288]{0}', space=vmem, size = 0x80000, scoped, tag = 'input window, operand 6, single buffered']
    #allocation6 [shape = 's32[1]{0}', space=sflag, size = 0x4, scoped, tag = 'scoped memory for tpu_custom_call.1']
    #allocation7 [shape = 'u8[4096]{0}', space=vmem, size = 0x1000, scoped, tag = 'output window, operand 0, single buffered']
    #allocation8 [shape = 'u8[4096]{0}', space=vmem, size = 0x1000, scoped, tag = 'output window, operand 2, single buffered']
    #allocation9 [shape = 's32[1]{0}', space=sflag, size = 0x4, scoped, tag = 'scoped memory for tpu_custom_call.1']
    %18 = vsyncpa [#allocation3], 0
    %19 = vsyncpa [#allocation6], 0
    %20 = vsyncpa [#allocation4], 0
    %21 = vsyncpa [#allocation9], 0
    // Predicated region
    $region2: #{tpu_custom_call.1} parent=1 // pred_check
      _
    $region3: #{tpu_custom_call.1} parent=1 // pred_check_branch
      %23 = sbr.rel (0) target = $region5
    $region4: #{tpu_custom_call.1} parent=1 // pred_region
      _
    $region5: #{tpu_custom_call.1} parent=1 // pred_fallthru
      _
    // Predicated region
    $region6: #{tpu_custom_call.1} parent=1 // pred_check
      _
    $region7: #{tpu_custom_call.1} parent=1 // pred_check_branch
      %25 = sbr.rel (0) target = $region9
    $region8: #{tpu_custom_call.1} parent=1 // pred_region
      _
    $region9: #{tpu_custom_call.1} parent=1 // pred_fallthru
      _
    // Predicated region
    $region10: #{tpu_custom_call.1} parent=1 // pred_check
      _
    $region11: #{tpu_custom_call.1} parent=1 // pred_check_branch
      %27 = sbr.rel (0) target = $region13
    $region12: #{tpu_custom_call.1} parent=1 // pred_region
      _
    $region13: #{tpu_custom_call.1} parent=1 // pred_fallthru
      _
    // Predicated region
    $region14: #{tpu_custom_call.1} parent=1 // pred_check
      _
    $region15: #{tpu_custom_call.1} parent=1 // pred_check_branch
      %29 = sbr.rel (0) target = $region17
    $region16: #{tpu_custom_call.1} parent=1 // pred_region
      _
    $region17: #{tpu_custom_call.1} parent=1 // pred_fallthru
      _
    // Predicated region
    $region18: #{tpu_custom_call.1} parent=1 // pred_check
      _
    $region19: #{tpu_custom_call.1} parent=1 // pred_check_branch
      %31 = sbr.rel (0) target = $region21
    $region20: #{tpu_custom_call.1} parent=1 // pred_region
      %s33 = ssub.s32 16384, 16384
      %34 = vsyncadd [#allocation3], %s33
      %s35 = sshll.u32 [#allocation2], 4
      %s36 = int_to_ptr.vmem [resolvable:$true] %s35
      %41 = dma.hbm_to_vmem [thread:$0]  %s4, 16384, %s36, [#allocation3], 256, 256, 16
    $region21: #{tpu_custom_call.1} parent=1 // pred_fallthru
      _
    // Predicated region
    $region22: #{tpu_custom_call.1} parent=1 // pred_check
      _
    $region23: #{tpu_custom_call.1} parent=1 // pred_check_branch
      %43 = sbr.rel (0) target = $region25
    $region24: #{tpu_custom_call.1} parent=1 // pred_region
      _
    $region25: #{tpu_custom_call.1} parent=1 // pred_fallthru
      _
    // Predicated region
    $region26: #{tpu_custom_call.1} parent=1 // pred_check
      _
    $region27: #{tpu_custom_call.1} parent=1 // pred_check_branch
      %45 = sbr.rel (0) target = $region29
    $region28: #{tpu_custom_call.1} parent=1 // pred_region
      %s47 = ssub.s32 16384, 16384
      %48 = vsyncadd [#allocation6], %s47
      %s49 = sshll.u32 [#allocation5], 4
      %s50 = int_to_ptr.vmem [resolvable:$true] %s49
      %55 = dma.hbm_to_vmem [thread:$0]  %s6, 16384, %s50, [#allocation6], 256, 256, 16
    $region29: #{tpu_custom_call.1} parent=1 // pred_fallthru
      _
    // Predicated region
    $region30: #{tpu_custom_call.1} parent=1 // pred_check
      _
    $region31: #{tpu_custom_call.1} parent=1 // pred_check_branch
      %57 = sbr.rel (0) target = $region33
    $region32: #{tpu_custom_call.1} parent=1 // pred_region
      _
    $region33: #{tpu_custom_call.1} parent=1 // pred_fallthru
      _
    // Predicated region
    $region34: #{tpu_custom_call.1} parent=1 // pred_check
      _
    $region35: #{tpu_custom_call.1} parent=1 // pred_check_branch
      %59 = sbr.rel (0) target = $region37
    $region36: #{tpu_custom_call.1} parent=1 // pred_region
      _
    $region37: #{tpu_custom_call.1} parent=1 // pred_fallthru
      _
    // Predicated region
    $region38: #{tpu_custom_call.1} parent=1 // pred_check
      _
    $region39: #{tpu_custom_call.1} parent=1 // pred_check_branch
      %61 = sbr.rel (0) target = $region41
    $region40: #{tpu_custom_call.1} parent=1 // pred_region
      _
    $region41: #{tpu_custom_call.1} parent=1 // pred_fallthru
      _
    // Predicated region
    $region42: #{tpu_custom_call.1} parent=1 // pred_check
      _
    $region43: #{tpu_custom_call.1} parent=1 // pred_check_branch
      %63 = sbr.rel (0) target = $region45
    $region44: #{tpu_custom_call.1} parent=1 // pred_region
      %64 = dma.done [#allocation3], 16384
    $region45: #{tpu_custom_call.1} parent=1 // pred_fallthru
      _
    // Predicated region
    $region46: #{tpu_custom_call.1} parent=1 // pred_check
      _
    $region47: #{tpu_custom_call.1} parent=1 // pred_check_branch
      %66 = sbr.rel (0) target = $region49
    $region48: #{tpu_custom_call.1} parent=1 // pred_region
      %67 = dma.done [#allocation6], 16384
    $region49: #{tpu_custom_call.1} parent=1 // pred_fallthru
      _
    %v69 = vld [vmem:[%s0] sm:$0xff]
    %v70 = vpack.c.bf16 %v69, %v69
    %v71 = vld [vmem:[%s2] sm:$0xff]
    %v72 = vld [vmem:[%s2 + $0x8] sm:$0xff]
    %v73 = vld [vmem:[%s2 + $0x10] sm:$0xff]
    %v74 = vld [vmem:[%s2 + $0x18] sm:$0xff]
    %v75 = vld [vmem:[%s2 + $0x20] sm:$0xff]
    %v76 = vld [vmem:[%s2 + $0x28] sm:$0xff]
    %v77 = vld [vmem:[%s2 + $0x30] sm:$0xff]
    %v78 = vld [vmem:[%s2 + $0x38] sm:$0xff]
    %v79 = vld [vmem:[%s2 + $0x40] sm:$0xff]
    %v80 = vld [vmem:[%s2 + $0x48] sm:$0xff]
    %v81 = vld [vmem:[%s2 + $0x50] sm:$0xff]
    %v82 = vld [vmem:[%s2 + $0x58] sm:$0xff]
    %v83 = vld [vmem:[%s2 + $0x60] sm:$0xff]
    %v84 = vld [vmem:[%s2 + $0x68] sm:$0xff]
    %v85 = vld [vmem:[%s2 + $0x70] sm:$0xff]
    %v86 = vld [vmem:[%s2 + $0x78] sm:$0xff]
    %v87 = vld [vmem:[%s3] sm:$0xff]
    %v89 = vlaneseq
    %v90 = vshrl.u32 %v89, 7
    %v91 = vsub.s32 0, %v90
    %v92 = vrot.slane %v87, %v91
    %v93 = vlaneseq
    %v94 = vshrl.u32 %v93, 7
    %v95 = vsub.s32 1, %v94
    %v96 = vrot.slane %v87, %v95
    %v97 = vlaneseq
    %v98 = vshrl.u32 %v97, 7
    %v99 = vsub.s32 2, %v98
    %v100 = vrot.slane %v87, %v99
    %v101 = vlaneseq
    %v102 = vshrl.u32 %v101, 7
    %v103 = vsub.s32 3, %v102
    %v104 = vrot.slane %v87, %v103
    %v105 = vlaneseq
    %v106 = vshrl.u32 %v105, 7
    %v107 = vsub.s32 4, %v106
    %v108 = vrot.slane %v87, %v107
    %v109 = vlaneseq
    %v110 = vshrl.u32 %v109, 7
    %v111 = vsub.s32 5, %v110
    %v112 = vrot.slane %v87, %v111
    %v113 = vlaneseq
    %v114 = vshrl.u32 %v113, 7
    %v115 = vsub.s32 6, %v114
    %v116 = vrot.slane %v87, %v115
    %v117 = vlaneseq
    %v118 = vshrl.u32 %v117, 7
    %v119 = vsub.s32 7, %v118
    %v120 = vrot.slane %v87, %v119
    %v145 = vunpack.c.l.b16 %v71
    %v146 = vunpack.c.h.b16 %v71
    %v147 = vunpack.c.l.b16 %v72
    %v148 = vunpack.c.h.b16 %v72
    %v149 = vunpack.c.l.b16 %v73
    %v150 = vunpack.c.h.b16 %v73
    %v151 = vunpack.c.l.b16 %v74
    %v152 = vunpack.c.h.b16 %v74
    %v153 = vunpack.c.l.b16 %v75
    %v154 = vunpack.c.h.b16 %v75
    %v155 = vunpack.c.l.b16 %v76
    %v156 = vunpack.c.h.b16 %v76
    %v157 = vunpack.c.l.b16 %v77
    %v158 = vunpack.c.h.b16 %v77
    %v159 = vunpack.c.l.b16 %v78
    %v160 = vunpack.c.h.b16 %v78
    %v161 = vunpack.c.l.b16 %v79
    %v162 = vunpack.c.h.b16 %v79
    %v163 = vunpack.c.l.b16 %v80
    %v164 = vunpack.c.h.b16 %v80
    %v165 = vunpack.c.l.b16 %v81
    %v166 = vunpack.c.h.b16 %v81
    %v167 = vunpack.c.l.b16 %v82
    %v168 = vunpack.c.h.b16 %v82
    %v169 = vunpack.c.l.b16 %v83
    %v170 = vunpack.c.h.b16 %v83
    %v171 = vunpack.c.l.b16 %v84
    %v172 = vunpack.c.h.b16 %v84
    %v173 = vunpack.c.l.b16 %v85
    %v174 = vunpack.c.h.b16 %v85
    %v175 = vunpack.c.l.b16 %v86
    %v176 = vunpack.c.h.b16 %v86
    %v177 = vpack.c.b16 %v153, %v145
    %v178 = vpack.c.b16 %v154, %v146
    %v179 = vpack.c.b16 %v155, %v147
    %v180 = vpack.c.b16 %v156, %v148
    %v181 = vpack.c.b16 %v157, %v149
    %v182 = vpack.c.b16 %v158, %v150
    %v183 = vpack.c.b16 %v159, %v151
    %v184 = vpack.c.b16 %v160, %v152
    %v185 = vpack.c.b16 %v169, %v161
    %v186 = vpack.c.b16 %v170, %v162
    %v187 = vpack.c.b16 %v171, %v163
    %v188 = vpack.c.b16 %v172, %v164
    %v189 = vpack.c.b16 %v173, %v165
    %v190 = vpack.c.b16 %v174, %v166
    %v191 = vpack.c.b16 %v175, %v167
    %v192 = vpack.c.b16 %v176, %v168
    %vm209 = vcmask 261120
    %v211 = vsel %vm209, %v70, 0
    %213 = vmatprep.subr.bf16.mxu0 %v178
    %214 = vmatpush1.bf16.msra.mxu0 %v177
    %215 = vmatprep.subr.bf16.mxu0 %v186
    %216 = vmatpush1.bf16.msra.mxu0 %v185
    %217 = vmatprep.subr.bf16.mxu0 0
    %218 = vmatpush1.bf16.msra.mxu0 0
    %219 = vmatprep.subr.bf16.mxu0 0
    %220 = vmatpush1.bf16.msra.mxu0 0
    %221 = vmatprep.subr.bf16.mxu0 0
    %222 = vmatpush1.bf16.msra.mxu0 0
    %223 = vmatprep.subr.bf16.mxu0 0
    %224 = vmatpush1.bf16.msra.mxu0 0
    %225 = vmatprep.subr.bf16.mxu0 0
    %226 = vmatpush1.bf16.msra.mxu0 0
    %227 = vmatprep.subr.bf16.mxu0 0
    %228 = vmatpush1.bf16.msra.mxu0 0
    %229 = vmatprep.subr.bf16.mxu0 0
    %230 = vmatpush1.bf16.msra.mxu0 0
    %231 = vmatprep.subr.bf16.mxu0 0
    %232 = vmatpush1.bf16.msra.mxu0 0
    %233 = vmatprep.subr.bf16.mxu0 0
    %234 = vmatpush1.bf16.msra.mxu0 0
    %235 = vmatprep.subr.bf16.mxu0 0
    %236 = vmatpush1.bf16.msra.mxu0 0
    %237 = vmatprep.subr.bf16.mxu0 0
    %238 = vmatpush1.bf16.msra.mxu0 0
    %239 = vmatprep.subr.bf16.mxu0 0
    %240 = vmatpush1.bf16.msra.mxu0 0
    %241 = vmatprep.subr.bf16.mxu0 0
    %242 = vmatpush1.bf16.msra.mxu0 0
    %243 = vmatprep.subr.bf16.mxu0 0
    %244 = vmatpush1.bf16.msra.mxu0 0
    %245 = vmatprep.mubr.bf16.mxu0 0
    %246 = vmatmul.mubr.bf16.gmra.mrb[0].mxu0 %v211
    %v247 = vpop.f32.mrb[0].mxu0
    %v248 = vadd.f32 %v92, %v247
    %v249 = vpop.f32.mrb[0].mxu0
    %v250 = vadd.f32 %v96, %v249
    %v251 = vpop.f32.mrb[0].mxu0
    %v252 = vpop.f32.mrb[0].mxu0
    %253 = vdwg.mxu0
    %254 = vmatprep.subr.bf16.mxu0 %v180
    %255 = vmatpush1.bf16.msra.mxu0 %v179
    %256 = vmatprep.subr.bf16.mxu0 %v188
    %257 = vmatpush1.bf16.msra.mxu0 %v187
    %258 = vmatprep.subr.bf16.mxu0 0
    %259 = vmatpush1.bf16.msra.mxu0 0
    %260 = vmatprep.subr.bf16.mxu0 0
    %261 = vmatpush1.bf16.msra.mxu0 0
    %262 = vmatprep.subr.bf16.mxu0 0
    %263 = vmatpush1.bf16.msra.mxu0 0
    %264 = vmatprep.subr.bf16.mxu0 0
    %265 = vmatpush1.bf16.msra.mxu0 0
    %266 = vmatprep.subr.bf16.mxu0 0
    %267 = vmatpush1.bf16.msra.mxu0 0
    %268 = vmatprep.subr.bf16.mxu0 0
    %269 = vmatpush1.bf16.msra.mxu0 0
    %270 = vmatprep.subr.bf16.mxu0 0
    %271 = vmatpush1.bf16.msra.mxu0 0
    %272 = vmatprep.subr.bf16.mxu0 0
    %273 = vmatpush1.bf16.msra.mxu0 0
    %274 = vmatprep.subr.bf16.mxu0 0
    %275 = vmatpush1.bf16.msra.mxu0 0
    %276 = vmatprep.subr.bf16.mxu0 0
    %277 = vmatpush1.bf16.msra.mxu0 0
    %278 = vmatprep.subr.bf16.mxu0 0
    %279 = vmatpush1.bf16.msra.mxu0 0
    %280 = vmatprep.subr.bf16.mxu0 0
    %281 = vmatpush1.bf16.msra.mxu0 0
    %282 = vmatprep.subr.bf16.mxu0 0
    %283 = vmatpush1.bf16.msra.mxu0 0
    %284 = vmatprep.subr.bf16.mxu0 0
    %285 = vmatpush1.bf16.msra.mxu0 0
    %286 = vmatprep.mubr.bf16.mxu0 0
    %287 = vmatmul.mubr.bf16.gmra.mrb[0].mxu0 %v211
    %v288 = vpop.f32.mrb[0].mxu0
    %v289 = vadd.f32 %v100, %v288
    %v290 = vpop.f32.mrb[0].mxu0
    %v291 = vadd.f32 %v104, %v290
    %v292 = vpop.f32.mrb[0].mxu0
    %v293 = vpop.f32.mrb[0].mxu0
    %294 = vdwg.mxu0
    %295 = vmatprep.subr.bf16.mxu0 %v182
    %296 = vmatpush1.bf16.msra.mxu0 %v181
    %297 = vmatprep.subr.bf16.mxu0 %v190
    %298 = vmatpush1.bf16.msra.mxu0 %v189
    %299 = vmatprep.subr.bf16.mxu0 0
    %300 = vmatpush1.bf16.msra.mxu0 0
    %301 = vmatprep.subr.bf16.mxu0 0
    %302 = vmatpush1.bf16.msra.mxu0 0
    %303 = vmatprep.subr.bf16.mxu0 0
    %304 = vmatpush1.bf16.msra.mxu0 0
    %305 = vmatprep.subr.bf16.mxu0 0
    %306 = vmatpush1.bf16.msra.mxu0 0
    %307 = vmatprep.subr.bf16.mxu0 0
    %308 = vmatpush1.bf16.msra.mxu0 0
    %309 = vmatprep.subr.bf16.mxu0 0
    %310 = vmatpush1.bf16.msra.mxu0 0
    %311 = vmatprep.subr.bf16.mxu0 0
    %312 = vmatpush1.bf16.msra.mxu0 0
    %313 = vmatprep.subr.bf16.mxu0 0
    %314 = vmatpush1.bf16.msra.mxu0 0
    %315 = vmatprep.subr.bf16.mxu0 0
    %316 = vmatpush1.bf16.msra.mxu0 0
    %317 = vmatprep.subr.bf16.mxu0 0
    %318 = vmatpush1.bf16.msra.mxu0 0
    %319 = vmatprep.subr.bf16.mxu0 0
    %320 = vmatpush1.bf16.msra.mxu0 0
    %321 = vmatprep.subr.bf16.mxu0 0
    %322 = vmatpush1.bf16.msra.mxu0 0
    %323 = vmatprep.subr.bf16.mxu0 0
    %324 = vmatpush1.bf16.msra.mxu0 0
    %325 = vmatprep.subr.bf16.mxu0 0
    %326 = vmatpush1.bf16.msra.mxu0 0
    %327 = vmatprep.mubr.bf16.mxu0 0
    %328 = vmatmul.mubr.bf16.gmra.mrb[0].mxu0 %v211
    %v329 = vpop.f32.mrb[0].mxu0
    %v330 = vadd.f32 %v108, %v329
    %v331 = vpop.f32.mrb[0].mxu0
    %v332 = vadd.f32 %v112, %v331
    %v333 = vpop.f32.mrb[0].mxu0
    %v334 = vpop.f32.mrb[0].mxu0
    %335 = vdwg.mxu0
    %336 = vmatprep.subr.bf16.mxu0 %v184
    %337 = vmatpush1.bf16.msra.mxu0 %v183
    %338 = vmatprep.subr.bf16.mxu0 %v192
    %339 = vmatpush1.bf16.msra.mxu0 %v191
    %340 = vmatprep.subr.bf16.mxu0 0
    %341 = vmatpush1.bf16.msra.mxu0 0
    %342 = vmatprep.subr.bf16.mxu0 0
    %343 = vmatpush1.bf16.msra.mxu0 0
    %344 = vmatprep.subr.bf16.mxu0 0
    %345 = vmatpush1.bf16.msra.mxu0 0
    %346 = vmatprep.subr.bf16.mxu0 0
    %347 = vmatpush1.bf16.msra.mxu0 0
    %348 = vmatprep.subr.bf16.mxu0 0
    %349 = vmatpush1.bf16.msra.mxu0 0
    %350 = vmatprep.subr.bf16.mxu0 0
    %351 = vmatpush1.bf16.msra.mxu0 0
    %352 = vmatprep.subr.bf16.mxu0 0
    %353 = vmatpush1.bf16.msra.mxu0 0
    %354 = vmatprep.subr.bf16.mxu0 0
    %355 = vmatpush1.bf16.msra.mxu0 0
    %356 = vmatprep.subr.bf16.mxu0 0
    %357 = vmatpush1.bf16.msra.mxu0 0
    %358 = vmatprep.subr.bf16.mxu0 0
    %359 = vmatpush1.bf16.msra.mxu0 0
    %360 = vmatprep.subr.bf16.mxu0 0
    %361 = vmatpush1.bf16.msra.mxu0 0
    %362 = vmatprep.subr.bf16.mxu0 0
    %363 = vmatpush1.bf16.msra.mxu0 0
    %364 = vmatprep.subr.bf16.mxu0 0
    %365 = vmatpush1.bf16.msra.mxu0 0
    %366 = vmatprep.subr.bf16.mxu0 0
    %367 = vmatpush1.bf16.msra.mxu0 0
    %368 = vmatprep.mubr.bf16.mxu0 0
    %369 = vmatmul.mubr.bf16.gmra.mrb[0].mxu0 %v211
    %v370 = vpop.f32.mrb[0].mxu0
    %v371 = vadd.f32 %v116, %v370
    %v372 = vpop.f32.mrb[0].mxu0
    %v373 = vadd.f32 %v120, %v372
    %v374 = vpop.f32.mrb[0].mxu0
    %v375 = vpop.f32.mrb[0].mxu0
    %376 = vdwg.mxu0
    %v377 = vmax.f32 %v248, 0.0
    %v378 = vmax.f32 %v250, 0.0
    %v379 = vmax.f32 %v289, 0.0
    %v380 = vmax.f32 %v291, 0.0
    %v381 = vmax.f32 %v330, 0.0
    %v382 = vmax.f32 %v332, 0.0
    %v383 = vmax.f32 %v371, 0.0
    %v384 = vmax.f32 %v373, 0.0
    %v385 = vpack.c.bf16 %v377, %v377
    %v386 = vpack.c.bf16 %v378, %v378
    %v387 = vpack.c.bf16 %v379, %v379
    %v388 = vpack.c.bf16 %v380, %v380
    %v389 = vld [vmem:[#allocation2] sm:$0xff]
    %v390 = vld [vmem:[#allocation2 + $0x8] sm:$0xff]
    %v391 = vld [vmem:[#allocation2 + $0x10] sm:$0xff]
    %v392 = vld [vmem:[#allocation2 + $0x18] sm:$0xff]
    %v393 = vld [vmem:[#allocation2 + $0x20] sm:$0xff]
    %v394 = vld [vmem:[#allocation2 + $0x28] sm:$0xff]
    %v395 = vld [vmem:[#allocation2 + $0x30] sm:$0xff]
    %v396 = vld [vmem:[#allocation2 + $0x38] sm:$0xff]
    %v397 = vld [vmem:[#allocation2 + $0x40] sm:$0xff]
    %v398 = vld [vmem:[#allocation2 + $0x48] sm:$0xff]
    %v399 = vld [vmem:[#allocation2 + $0x50] sm:$0xff]
    %v400 = vld [vmem:[#allocation2 + $0x58] sm:$0xff]
    %v401 = vld [vmem:[#allocation2 + $0x60] sm:$0xff]
    %v402 = vld [vmem:[#allocation2 + $0x68] sm:$0xff]
    %v403 = vld [vmem:[#allocation2 + $0x70] sm:$0xff]
    %v404 = vld [vmem:[#allocation2 + $0x78] sm:$0xff]
    %v405 = vld [vmem:[#allocation2 + $0x80] sm:$0xff]
    %v406 = vld [vmem:[#allocation2 + $0x88] sm:$0xff]
    %v407 = vld [vmem:[#allocation2 + $0x90] sm:$0xff]
    %v408 = vld [vmem:[#allocation2 + $0x98] sm:$0xff]
    %v409 = vld [vmem:[#allocation2 + $0xa0] sm:$0xff]
    %v410 = vld [vmem:[#allocation2 + $0xa8] sm:$0xff]
    %v411 = vld [vmem:[#allocation2 + $0xb0] sm:$0xff]
    %v412 = vld [vmem:[#allocation2 + $0xb8] sm:$0xff]
    %v413 = vld [vmem:[#allocation2 + $0xc0] sm:$0xff]
    %v414 = vld [vmem:[#allocation2 + $0xc8] sm:$0xff]
    %v415 = vld [vmem:[#allocation2 + $0xd0] sm:$0xff]
    %v416 = vld [vmem:[#allocation2 + $0xd8] sm:$0xff]
    %v417 = vld [vmem:[#allocation2 + $0xe0] sm:$0xff]
    %v418 = vld [vmem:[#allocation2 + $0xe8] sm:$0xff]
    %v419 = vld [vmem:[#allocation2 + $0xf0] sm:$0xff]
    %v420 = vld [vmem:[#allocation2 + $0xf8] sm:$0xff]
    %v421 = vld [vmem:[#allocation2 + $0x100] sm:$0xff]
    %v422 = vld [vmem:[#allocation2 + $0x108] sm:$0xff]
    %v423 = vld [vmem:[#allocation2 + $0x110] sm:$0xff]
    %v424 = vld [vmem:[#allocation2 + $0x118] sm:$0xff]
    %v425 = vld [vmem:[#allocation2 + $0x120] sm:$0xff]
    %v426 = vld [vmem:[#allocation2 + $0x128] sm:$0xff]
    %v427 = vld [vmem:[#allocation2 + $0x130] sm:$0xff]
    %v428 = vld [vmem:[#allocation2 + $0x138] sm:$0xff]
    %v429 = vld [vmem:[#allocation2 + $0x140] sm:$0xff]
    %v430 = vld [vmem:[#allocation2 + $0x148] sm:$0xff]
    %v431 = vld [vmem:[#allocation2 + $0x150] sm:$0xff]
    %v432 = vld [vmem:[#allocation2 + $0x158] sm:$0xff]
    %v433 = vld [vmem:[#allocation2 + $0x160] sm:$0xff]
    %v434 = vld [vmem:[#allocation2 + $0x168] sm:$0xff]
    %v435 = vld [vmem:[#allocation2 + $0x170] sm:$0xff]
    %v436 = vld [vmem:[#allocation2 + $0x178] sm:$0xff]
    %v437 = vld [vmem:[#allocation2 + $0x180] sm:$0xff]
    %v438 = vld [vmem:[#allocation2 + $0x188] sm:$0xff]
    %v439 = vld [vmem:[#allocation2 + $0x190] sm:$0xff]
    %v440 = vld [vmem:[#allocation2 + $0x198] sm:$0xff]
    %v441 = vld [vmem:[#allocation2 + $0x1a0] sm:$0xff]
    %v442 = vld [vmem:[#allocation2 + $0x1a8] sm:$0xff]
    %v443 = vld [vmem:[#allocation2 + $0x1b0] sm:$0xff]
    %v444 = vld [vmem:[#allocation2 + $0x1b8] sm:$0xff]
    %v445 = vld [vmem:[#allocation2 + $0x1c0] sm:$0xff]
    %v446 = vld [vmem:[#allocation2 + $0x1c8] sm:$0xff]
    %v447 = vld [vmem:[#allocation2 + $0x1d0] sm:$0xff]
    %v448 = vld [vmem:[#allocation2 + $0x1d8] sm:$0xff]
    %v449 = vld [vmem:[#allocation2 + $0x1e0] sm:$0xff]
    %v450 = vld [vmem:[#allocation2 + $0x1e8] sm:$0xff]
    %v451 = vld [vmem:[#allocation2 + $0x1f0] sm:$0xff]
    %v452 = vld [vmem:[#allocation2 + $0x1f8] sm:$0xff]
    %v453 = vld [vmem:[#allocation2 + $0x200] sm:$0xff]
    %v454 = vld [vmem:[#allocation2 + $0x208] sm:$0xff]
    %v455 = vld [vmem:[#allocation2 + $0x210] sm:$0xff]
    %v456 = vld [vmem:[#allocation2 + $0x218] sm:$0xff]
    %v457 = vld [vmem:[#allocation2 + $0x220] sm:$0xff]
    %v458 = vld [vmem:[#allocation2 + $0x228] sm:$0xff]
    %v459 = vld [vmem:[#allocation2 + $0x230] sm:$0xff]
    %v460 = vld [vmem:[#allocation2 + $0x238] sm:$0xff]
    %v461 = vld [vmem:[#allocation2 + $0x240] sm:$0xff]
    %v462 = vld [vmem:[#allocation2 + $0x248] sm:$0xff]
    %v463 = vld [vmem:[#allocation2 + $0x250] sm:$0xff]
    %v464 = vld [vmem:[#allocation2 + $0x258] sm:$0xff]
    %v465 = vld [vmem:[#allocation2 + $0x260] sm:$0xff]
    %v466 = vld [vmem:[#allocation2 + $0x268] sm:$0xff]
    %v467 = vld [vmem:[#allocation2 + $0x270] sm:$0xff]
    %v468 = vld [vmem:[#allocation2 + $0x278] sm:$0xff]
    %v469 = vld [vmem:[#allocation2 + $0x280] sm:$0xff]
    %v470 = vld [vmem:[#allocation2 + $0x288] sm:$0xff]
    %v471 = vld [vmem:[#allocation2 + $0x290] sm:$0xff]
    %v472 = vld [vmem:[#allocation2 + $0x298] sm:$0xff]
    %v473 = vld [vmem:[#allocation2 + $0x2a0] sm:$0xff]
    %v474 = vld [vmem:[#allocation2 + $0x2a8] sm:$0xff]
    %v475 = vld [vmem:[#allocation2 + $0x2b0] sm:$0xff]
    %v476 = vld [vmem:[#allocation2 + $0x2b8] sm:$0xff]
    %v477 = vld [vmem:[#allocation2 + $0x2c0] sm:$0xff]
    %v478 = vld [vmem:[#allocation2 + $0x2c8] sm:$0xff]
    %v479 = vld [vmem:[#allocation2 + $0x2d0] sm:$0xff]
    %v480 = vld [vmem:[#allocation2 + $0x2d8] sm:$0xff]
    %v481 = vld [vmem:[#allocation2 + $0x2e0] sm:$0xff]
    %v482 = vld [vmem:[#allocation2 + $0x2e8] sm:$0xff]
    %v483 = vld [vmem:[#allocation2 + $0x2f0] sm:$0xff]
    %v484 = vld [vmem:[#allocation2 + $0x2f8] sm:$0xff]
    %v485 = vld [vmem:[#allocation2 + $0x300] sm:$0xff]
    %v486 = vld [vmem:[#allocation2 + $0x308] sm:$0xff]
    %v487 = vld [vmem:[#allocation2 + $0x310] sm:$0xff]
    %v488 = vld [vmem:[#allocation2 + $0x318] sm:$0xff]
    %v489 = vld [vmem:[#allocation2 + $0x320] sm:$0xff]
    %v490 = vld [vmem:[#allocation2 + $0x328] sm:$0xff]
    %v491 = vld [vmem:[#allocation2 + $0x330] sm:$0xff]
    %v492 = vld [vmem:[#allocation2 + $0x338] sm:$0xff]
    %v493 = vld [vmem:[#allocation2 + $0x340] sm:$0xff]
    %v494 = vld [vmem:[#allocation2 + $0x348] sm:$0xff]
    %v495 = vld [vmem:[#allocation2 + $0x350] sm:$0xff]
    %v496 = vld [vmem:[#allocation2 + $0x358] sm:$0xff]
    %v497 = vld [vmem:[#allocation2 + $0x360] sm:$0xff]
    %v498 = vld [vmem:[#allocation2 + $0x368] sm:$0xff]
    %v499 = vld [vmem:[#allocation2 + $0x370] sm:$0xff]
    %v500 = vld [vmem:[#allocation2 + $0x378] sm:$0xff]
    %v501 = vld [vmem:[#allocation2 + $0x380] sm:$0xff]
    %v502 = vld [vmem:[#allocation2 + $0x388] sm:$0xff]
    %v503 = vld [vmem:[#allocation2 + $0x390] sm:$0xff]
    %v504 = vld [vmem:[#allocation2 + $0x398] sm:$0xff]
    %v505 = vld [vmem:[#allocation2 + $0x3a0] sm:$0xff]
    %v506 = vld [vmem:[#allocation2 + $0x3a8] sm:$0xff]
    %v507 = vld [vmem:[#allocation2 + $0x3b0] sm:$0xff]
    %v508 = vld [vmem:[#allocation2 + $0x3b8] sm:$0xff]
    %v509 = vld [vmem:[#allocation2 + $0x3c0] sm:$0xff]
    %v510 = vld [vmem:[#allocation2 + $0x3c8] sm:$0xff]
    %v511 = vld [vmem:[#allocation2 + $0x3d0] sm:$0xff]
    %v512 = vld [vmem:[#allocation2 + $0x3d8] sm:$0xff]
    %v513 = vld [vmem:[#allocation2 + $0x3e0] sm:$0xff]
    %v514 = vld [vmem:[#allocation2 + $0x3e8] sm:$0xff]
    %v515 = vld [vmem:[#allocation2 + $0x3f0] sm:$0xff]
    %v516 = vld [vmem:[#allocation2 + $0x3f8] sm:$0xff]
    %v517 = vld [vmem:[%s5] sm:$0xf]
    %v519 = vlaneseq
    %v520 = vshrl.u32 %v519, 7
    %v521 = vsub.s32 0, %v520
    %v522 = vrot.slane %v517, %v521
    %v523 = vlaneseq
    %v524 = vshrl.u32 %v523, 7
    %v525 = vsub.s32 1, %v524
    %v526 = vrot.slane %v517, %v525
    %v527 = vlaneseq
    %v528 = vshrl.u32 %v527, 7
    %v529 = vsub.s32 2, %v528
    %v530 = vrot.slane %v517, %v529
    %v531 = vlaneseq
    %v532 = vshrl.u32 %v531, 7
    %v533 = vsub.s32 3, %v532
    %v534 = vrot.slane %v517, %v533
    %v667 = vunpack.c.l.b16 %v389
    %v668 = vunpack.c.h.b16 %v389
    %v669 = vunpack.c.l.b16 %v390
    %v670 = vunpack.c.h.b16 %v390
    %v671 = vunpack.c.l.b16 %v391
    %v672 = vunpack.c.h.b16 %v391
    %v673 = vunpack.c.l.b16 %v392
    %v674 = vunpack.c.h.b16 %v392
    %v675 = vunpack.c.l.b16 %v393
    %v676 = vunpack.c.h.b16 %v393
    %v677 = vunpack.c.l.b16 %v394
    %v678 = vunpack.c.h.b16 %v394
    %v679 = vunpack.c.l.b16 %v395
    %v680 = vunpack.c.h.b16 %v395
    %v681 = vunpack.c.l.b16 %v396
    %v682 = vunpack.c.h.b16 %v396
    %v683 = vunpack.c.l.b16 %v397
    %v684 = vunpack.c.h.b16 %v397
    %v685 = vunpack.c.l.b16 %v398
    %v686 = vunpack.c.h.b16 %v398
    %v687 = vunpack.c.l.b16 %v399
    %v688 = vunpack.c.h.b16 %v399
    %v689 = vunpack.c.l.b16 %v400
    %v690 = vunpack.c.h.b16 %v400
    %v691 = vunpack.c.l.b16 %v401
    %v692 = vunpack.c.h.b16 %v401
    %v693 = vunpack.c.l.b16 %v402
    %v694 = vunpack.c.h.b16 %v402
    %v695 = vunpack.c.l.b16 %v403
    %v696 = vunpack.c.h.b16 %v403
    %v697 = vunpack.c.l.b16 %v404
    %v698 = vunpack.c.h.b16 %v404
    %v699 = vunpack.c.l.b16 %v405
    %v700 = vunpack.c.h.b16 %v405
    %v701 = vunpack.c.l.b16 %v406
    %v702 = vunpack.c.h.b16 %v406
    %v703 = vunpack.c.l.b16 %v407
    %v704 = vunpack.c.h.b16 %v407
    %v705 = vunpack.c.l.b16 %v408
    %v706 = vunpack.c.h.b16 %v408
    %v707 = vunpack.c.l.b16 %v409
    %v708 = vunpack.c.h.b16 %v409
    %v709 = vunpack.c.l.b16 %v410
    %v710 = vunpack.c.h.b16 %v410
    %v711 = vunpack.c.l.b16 %v411
    %v712 = vunpack.c.h.b16 %v411
    %v713 = vunpack.c.l.b16 %v412
    %v714 = vunpack.c.h.b16 %v412
    %v715 = vunpack.c.l.b16 %v413
    %v716 = vunpack.c.h.b16 %v413
    %v717 = vunpack.c.l.b16 %v414
    %v718 = vunpack.c.h.b16 %v414
    %v719 = vunpack.c.l.b16 %v415
    %v720 = vunpack.c.h.b16 %v415
    %v721 = vunpack.c.l.b16 %v416
    %v722 = vunpack.c.h.b16 %v416
    %v723 = vunpack.c.l.b16 %v417
    %v724 = vunpack.c.h.b16 %v417
    %v725 = vunpack.c.l.b16 %v418
    %v726 = vunpack.c.h.b16 %v418
    %v727 = vunpack.c.l.b16 %v419
    %v728 = vunpack.c.h.b16 %v419
    %v729 = vunpack.c.l.b16 %v420
    %v730 = vunpack.c.h.b16 %v420
    %v731 = vunpack.c.l.b16 %v421
    %v732 = vunpack.c.h.b16 %v421
    %v733 = vunpack.c.l.b16 %v422
    %v734 = vunpack.c.h.b16 %v422
    %v735 = vunpack.c.l.b16 %v423
    %v736 = vunpack.c.h.b16 %v423
    %v737 = vunpack.c.l.b16 %v424
    %v738 = vunpack.c.h.b16 %v424
    %v739 = vunpack.c.l.b16 %v425
    %v740 = vunpack.c.h.b16 %v425
    %v741 = vunpack.c.l.b16 %v426
    %v742 = vunpack.c.h.b16 %v426
    %v743 = vunpack.c.l.b16 %v427
    %v744 = vunpack.c.h.b16 %v427
    %v745 = vunpack.c.l.b16 %v428
    %v746 = vunpack.c.h.b16 %v428
    %v747 = vunpack.c.l.b16 %v429
    %v748 = vunpack.c.h.b16 %v429
    %v749 = vunpack.c.l.b16 %v430
    %v750 = vunpack.c.h.b16 %v430
    %v751 = vunpack.c.l.b16 %v431
    %v752 = vunpack.c.h.b16 %v431
    %v753 = vunpack.c.l.b16 %v432
    %v754 = vunpack.c.h.b16 %v432
    %v755 = vunpack.c.l.b16 %v433
    %v756 = vunpack.c.h.b16 %v433
    %v757 = vunpack.c.l.b16 %v434
    %v758 = vunpack.c.h.b16 %v434
    %v759 = vunpack.c.l.b16 %v435
    %v760 = vunpack.c.h.b16 %v435
    %v761 = vunpack.c.l.b16 %v436
    %v762 = vunpack.c.h.b16 %v436
    %v763 = vunpack.c.l.b16 %v437
    %v764 = vunpack.c.h.b16 %v437
    %v765 = vunpack.c.l.b16 %v438
    %v766 = vunpack.c.h.b16 %v438
    %v767 = vunpack.c.l.b16 %v439
    %v768 = vunpack.c.h.b16 %v439
    %v769 = vunpack.c.l.b16 %v440
    %v770 = vunpack.c.h.b16 %v440
    %v771 = vunpack.c.l.b16 %v441
    %v772 = vunpack.c.h.b16 %v441
    %v773 = vunpack.c.l.b16 %v442
    %v774 = vunpack.c.h.b16 %v442
    %v775 = vunpack.c.l.b16 %v443
    %v776 = vunpack.c.h.b16 %v443
    %v777 = vunpack.c.l.b16 %v444
    %v778 = vunpack.c.h.b16 %v444
    %v779 = vunpack.c.l.b16 %v445
    %v780 = vunpack.c.h.b16 %v445
    %v781 = vunpack.c.l.b16 %v446
    %v782 = vunpack.c.h.b16 %v446
    %v783 = vunpack.c.l.b16 %v447
    %v784 = vunpack.c.h.b16 %v447
    %v785 = vunpack.c.l.b16 %v448
    %v786 = vunpack.c.h.b16 %v448
    %v787 = vunpack.c.l.b16 %v449
    %v788 = vunpack.c.h.b16 %v449
    %v789 = vunpack.c.l.b16 %v450
    %v790 = vunpack.c.h.b16 %v450
    %v791 = vunpack.c.l.b16 %v451
    %v792 = vunpack.c.h.b16 %v451
    %v793 = vunpack.c.l.b16 %v452
    %v794 = vunpack.c.h.b16 %v452
    %v795 = vunpack.c.l.b16 %v453
    %v796 = vunpack.c.h.b16 %v453
    %v797 = vunpack.c.l.b16 %v454
    %v798 = vunpack.c.h.b16 %v454
    %v799 = vunpack.c.l.b16 %v455
    %v800 = vunpack.c.h.b16 %v455
    %v801 = vunpack.c.l.b16 %v456
    %v802 = vunpack.c.h.b16 %v456
    %v803 = vunpack.c.l.b16 %v457
    %v804 = vunpack.c.h.b16 %v457
    %v805 = vunpack.c.l.b16 %v458
    %v806 = vunpack.c.h.b16 %v458
    %v807 = vunpack.c.l.b16 %v459
    %v808 = vunpack.c.h.b16 %v459
    %v809 = vunpack.c.l.b16 %v460
    %v810 = vunpack.c.h.b16 %v460
    %v811 = vunpack.c.l.b16 %v461
    %v812 = vunpack.c.h.b16 %v461
    %v813 = vunpack.c.l.b16 %v462
    %v814 = vunpack.c.h.b16 %v462
    %v815 = vunpack.c.l.b16 %v463
    %v816 = vunpack.c.h.b16 %v463
    %v817 = vunpack.c.l.b16 %v464
    %v818 = vunpack.c.h.b16 %v464
    %v819 = vunpack.c.l.b16 %v465
    %v820 = vunpack.c.h.b16 %v465
    %v821 = vunpack.c.l.b16 %v466
    %v822 = vunpack.c.h.b16 %v466
    %v823 = vunpack.c.l.b16 %v467
    %v824 = vunpack.c.h.b16 %v467
    %v825 = vunpack.c.l.b16 %v468
    %v826 = vunpack.c.h.b16 %v468
    %v827 = vunpack.c.l.b16 %v469
    %v828 = vunpack.c.h.b16 %v469
    %v829 = vunpack.c.l.b16 %v470
    %v830 = vunpack.c.h.b16 %v470
    %v831 = vunpack.c.l.b16 %v471
    %v832 = vunpack.c.h.b16 %v471
    %v833 = vunpack.c.l.b16 %v472
    %v834 = vunpack.c.h.b16 %v472
    %v835 = vunpack.c.l.b16 %v473
    %v836 = vunpack.c.h.b16 %v473
    %v837 = vunpack.c.l.b16 %v474
    %v838 = vunpack.c.h.b16 %v474
    %v839 = vunpack.c.l.b16 %v475
    %v840 = vunpack.c.h.b16 %v475
    %v841 = vunpack.c.l.b16 %v476
    %v842 = vunpack.c.h.b16 %v476
    %v843 = vunpack.c.l.b16 %v477
    %v844 = vunpack.c.h.b16 %v477
    %v845 = vunpack.c.l.b16 %v478
    %v846 = vunpack.c.h.b16 %v478
    %v847 = vunpack.c.l.b16 %v479
    %v848 = vunpack.c.h.b16 %v479
    %v849 = vunpack.c.l.b16 %v480
    %v850 = vunpack.c.h.b16 %v480
    %v851 = vunpack.c.l.b16 %v481
    %v852 = vunpack.c.h.b16 %v481
    %v853 = vunpack.c.l.b16 %v482
    %v854 = vunpack.c.h.b16 %v482
    %v855 = vunpack.c.l.b16 %v483
    %v856 = vunpack.c.h.b16 %v483
    %v857 = vunpack.c.l.b16 %v484
    %v858 = vunpack.c.h.b16 %v484
    %v859 = vunpack.c.l.b16 %v485
    %v860 = vunpack.c.h.b16 %v485
    %v861 = vunpack.c.l.b16 %v486
    %v862 = vunpack.c.h.b16 %v486
    %v863 = vunpack.c.l.b16 %v487
    %v864 = vunpack.c.h.b16 %v487
    %v865 = vunpack.c.l.b16 %v488
    %v866 = vunpack.c.h.b16 %v488
    %v867 = vunpack.c.l.b16 %v489
    %v868 = vunpack.c.h.b16 %v489
    %v869 = vunpack.c.l.b16 %v490
    %v870 = vunpack.c.h.b16 %v490
    %v871 = vunpack.c.l.b16 %v491
    %v872 = vunpack.c.h.b16 %v491
    %v873 = vunpack.c.l.b16 %v492
    %v874 = vunpack.c.h.b16 %v492
    %v875 = vunpack.c.l.b16 %v493
    %v876 = vunpack.c.h.b16 %v493
    %v877 = vunpack.c.l.b16 %v494
    %v878 = vunpack.c.h.b16 %v494
    %v879 = vunpack.c.l.b16 %v495
    %v880 = vunpack.c.h.b16 %v495
    %v881 = vunpack.c.l.b16 %v496
    %v882 = vunpack.c.h.b16 %v496
    %v883 = vunpack.c.l.b16 %v497
    %v884 = vunpack.c.h.b16 %v497
    %v885 = vunpack.c.l.b16 %v498
    %v886 = vunpack.c.h.b16 %v498
    %v887 = vunpack.c.l.b16 %v499
    %v888 = vunpack.c.h.b16 %v499
    %v889 = vunpack.c.l.b16 %v500
    %v890 = vunpack.c.h.b16 %v500
    %v891 = vunpack.c.l.b16 %v501
    %v892 = vunpack.c.h.b16 %v501
    %v893 = vunpack.c.l.b16 %v502
    %v894 = vunpack.c.h.b16 %v502
    %v895 = vunpack.c.l.b16 %v503
    %v896 = vunpack.c.h.b16 %v503
    %v897 = vunpack.c.l.b16 %v504
    %v898 = vunpack.c.h.b16 %v504
    %v899 = vunpack.c.l.b16 %v505
    %v900 = vunpack.c.h.b16 %v505
    %v901 = vunpack.c.l.b16 %v506
    %v902 = vunpack.c.h.b16 %v506
    %v903 = vunpack.c.l.b16 %v507
    %v904 = vunpack.c.h.b16 %v507
    %v905 = vunpack.c.l.b16 %v508
    %v906 = vunpack.c.h.b16 %v508
    %v907 = vunpack.c.l.b16 %v509
    %v908 = vunpack.c.h.b16 %v509
    %v909 = vunpack.c.l.b16 %v510
    %v910 = vunpack.c.h.b16 %v510
    %v911 = vunpack.c.l.b16 %v511
    %v912 = vunpack.c.h.b16 %v511
    %v913 = vunpack.c.l.b16 %v512
    %v914 = vunpack.c.h.b16 %v512
    %v915 = vunpack.c.l.b16 %v513
    %v916 = vunpack.c.h.b16 %v513
    %v917 = vunpack.c.l.b16 %v514
    %v918 = vunpack.c.h.b16 %v514
    %v919 = vunpack.c.l.b16 %v515
    %v920 = vunpack.c.h.b16 %v515
    %v921 = vunpack.c.l.b16 %v516
    %v922 = vunpack.c.h.b16 %v516
    %v923 = vpack.c.b16 %v671, %v667
    %v924 = vpack.c.b16 %v672, %v668
    %v925 = vpack.c.b16 %v673, %v669
    %v926 = vpack.c.b16 %v674, %v670
    %v927 = vpack.c.b16 %v679, %v675
    %v928 = vpack.c.b16 %v680, %v676
    %v929 = vpack.c.b16 %v681, %v677
    %v930 = vpack.c.b16 %v682, %v678
    %v931 = vpack.c.b16 %v687, %v683
    %v932 = vpack.c.b16 %v688, %v684
    %v933 = vpack.c.b16 %v689, %v685
    %v934 = vpack.c.b16 %v690, %v686
    %v935 = vpack.c.b16 %v695, %v691
    %v936 = vpack.c.b16 %v696, %v692
    %v937 = vpack.c.b16 %v697, %v693
    %v938 = vpack.c.b16 %v698, %v694
    %v939 = vpack.c.b16 %v703, %v699
    %v940 = vpack.c.b16 %v704, %v700
    %v941 = vpack.c.b16 %v705, %v701
    %v942 = vpack.c.b16 %v706, %v702
    %v943 = vpack.c.b16 %v711, %v707
    %v944 = vpack.c.b16 %v712, %v708
    %v945 = vpack.c.b16 %v713, %v709
    %v946 = vpack.c.b16 %v714, %v710
    %v947 = vpack.c.b16 %v719, %v715
    %v948 = vpack.c.b16 %v720, %v716
    %v949 = vpack.c.b16 %v721, %v717
    %v950 = vpack.c.b16 %v722, %v718
    %v951 = vpack.c.b16 %v727, %v723
    %v952 = vpack.c.b16 %v728, %v724
    %v953 = vpack.c.b16 %v729, %v725
    %v954 = vpack.c.b16 %v730, %v726
    %v955 = vpack.c.b16 %v735, %v731
    %v956 = vpack.c.b16 %v736, %v732
    %v957 = vpack.c.b16 %v737, %v733
    %v958 = vpack.c.b16 %v738, %v734
    %v959 = vpack.c.b16 %v743, %v739
    %v960 = vpack.c.b16 %v744, %v740
    %v961 = vpack.c.b16 %v745, %v741
    %v962 = vpack.c.b16 %v746, %v742
    %v963 = vpack.c.b16 %v751, %v747
    %v964 = vpack.c.b16 %v752, %v748
    %v965 = vpack.c.b16 %v753, %v749
    %v966 = vpack.c.b16 %v754, %v750
    %v967 = vpack.c.b16 %v759, %v755
    %v968 = vpack.c.b16 %v760, %v756
    %v969 = vpack.c.b16 %v761, %v757
    %v970 = vpack.c.b16 %v762, %v758
    %v971 = vpack.c.b16 %v767, %v763
    %v972 = vpack.c.b16 %v768, %v764
    %v973 = vpack.c.b16 %v769, %v765
    %v974 = vpack.c.b16 %v770, %v766
    %v975 = vpack.c.b16 %v775, %v771
    %v976 = vpack.c.b16 %v776, %v772
    %v977 = vpack.c.b16 %v777, %v773
    %v978 = vpack.c.b16 %v778, %v774
    %v979 = vpack.c.b16 %v783, %v779
    %v980 = vpack.c.b16 %v784, %v780
    %v981 = vpack.c.b16 %v785, %v781
    %v982 = vpack.c.b16 %v786, %v782
    %v983 = vpack.c.b16 %v791, %v787
    %v984 = vpack.c.b16 %v792, %v788
    %v985 = vpack.c.b16 %v793, %v789
    %v986 = vpack.c.b16 %v794, %v790
    %v987 = vpack.c.b16 %v799, %v795
    %v988 = vpack.c.b16 %v800, %v796
    %v989 = vpack.c.b16 %v801, %v797
    %v990 = vpack.c.b16 %v802, %v798
    %v991 = vpack.c.b16 %v807, %v803
    %v992 = vpack.c.b16 %v808, %v804
    %v993 = vpack.c.b16 %v809, %v805
    %v994 = vpack.c.b16 %v810, %v806
    %v995 = vpack.c.b16 %v815, %v811
    %v996 = vpack.c.b16 %v816, %v812
    %v997 = vpack.c.b16 %v817, %v813
    %v998 = vpack.c.b16 %v818, %v814
    %v999 = vpack.c.b16 %v823, %v819
    %v1000 = vpack.c.b16 %v824, %v820
    %v1001 = vpack.c.b16 %v825, %v821
    %v1002 = vpack.c.b16 %v826, %v822
    %v1003 = vpack.c.b16 %v831, %v827
    %v1004 = vpack.c.b16 %v832, %v828
    %v1005 = vpack.c.b16 %v833, %v829
    %v1006 = vpack.c.b16 %v834, %v830
    %v1007 = vpack.c.b16 %v839, %v835
    %v1008 = vpack.c.b16 %v840, %v836
    %v1009 = vpack.c.b16 %v841, %v837
    %v1010 = vpack.c.b16 %v842, %v838
    %v1011 = vpack.c.b16 %v847, %v843
    %v1012 = vpack.c.b16 %v848, %v844
    %v1013 = vpack.c.b16 %v849, %v845
    %v1014 = vpack.c.b16 %v850, %v846
    %v1015 = vpack.c.b16 %v855, %v851
    %v1016 = vpack.c.b16 %v856, %v852
    %v1017 = vpack.c.b16 %v857, %v853
    %v1018 = vpack.c.b16 %v858, %v854
    %v1019 = vpack.c.b16 %v863, %v859
    %v1020 = vpack.c.b16 %v864, %v860
    %v1021 = vpack.c.b16 %v865, %v861
    %v1022 = vpack.c.b16 %v866, %v862
    %v1023 = vpack.c.b16 %v871, %v867
    %v1024 = vpack.c.b16 %v872, %v868
    %v1025 = vpack.c.b16 %v873, %v869
    %v1026 = vpack.c.b16 %v874, %v870
    %v1027 = vpack.c.b16 %v879, %v875
    %v1028 = vpack.c.b16 %v880, %v876
    %v1029 = vpack.c.b16 %v881, %v877
    %v1030 = vpack.c.b16 %v882, %v878
    %v1031 = vpack.c.b16 %v887, %v883
    %v1032 = vpack.c.b16 %v888, %v884
    %v1033 = vpack.c.b16 %v889, %v885
    %v1034 = vpack.c.b16 %v890, %v886
    %v1035 = vpack.c.b16 %v895, %v891
    %v1036 = vpack.c.b16 %v896, %v892
    %v1037 = vpack.c.b16 %v897, %v893
    %v1038 = vpack.c.b16 %v898, %v894
    %v1039 = vpack.c.b16 %v903, %v899
    %v1040 = vpack.c.b16 %v904, %v900
    %v1041 = vpack.c.b16 %v905, %v901
    %v1042 = vpack.c.b16 %v906, %v902
    %v1043 = vpack.c.b16 %v911, %v907
    %v1044 = vpack.c.b16 %v912, %v908
    %v1045 = vpack.c.b16 %v913, %v909
    %v1046 = vpack.c.b16 %v914, %v910
    %v1047 = vpack.c.b16 %v919, %v915
    %v1048 = vpack.c.b16 %v920, %v916
    %v1049 = vpack.c.b16 %v921, %v917
    %v1050 = vpack.c.b16 %v922, %v918
    %1179 = vmatprep.subr.bf16.mxu0 %v924
    %1180 = vmatpush1.bf16.msra.mxu0 %v923
    %1181 = vmatprep.subr.bf16.mxu0 %v928
    %1182 = vmatpush1.bf16.msra.mxu0 %v927
    %1183 = vmatprep.subr.bf16.mxu0 %v932
    %1184 = vmatpush1.bf16.msra.mxu0 %v931
    %1185 = vmatprep.subr.bf16.mxu0 %v936
    %1186 = vmatpush1.bf16.msra.mxu0 %v935
    %1187 = vmatprep.subr.bf16.mxu0 %v940
    %1188 = vmatpush1.bf16.msra.mxu0 %v939
    %1189 = vmatprep.subr.bf16.mxu0 %v944
    %1190 = vmatpush1.bf16.msra.mxu0 %v943
    %1191 = vmatprep.subr.bf16.mxu0 %v948
    %1192 = vmatpush1.bf16.msra.mxu0 %v947
    %1193 = vmatprep.subr.bf16.mxu0 %v952
    %1194 = vmatpush1.bf16.msra.mxu0 %v951
    %1195 = vmatprep.subr.bf16.mxu0 %v956
    %1196 = vmatpush1.bf16.msra.mxu0 %v955
    %1197 = vmatprep.subr.bf16.mxu0 %v960
    %1198 = vmatpush1.bf16.msra.mxu0 %v959
    %1199 = vmatprep.subr.bf16.mxu0 %v964
    %1200 = vmatpush1.bf16.msra.mxu0 %v963
    %1201 = vmatprep.subr.bf16.mxu0 %v968
    %1202 = vmatpush1.bf16.msra.mxu0 %v967
    %1203 = vmatprep.subr.bf16.mxu0 %v972
    %1204 = vmatpush1.bf16.msra.mxu0 %v971
    %1205 = vmatprep.subr.bf16.mxu0 %v976
    %1206 = vmatpush1.bf16.msra.mxu0 %v975
    %1207 = vmatprep.subr.bf16.mxu0 %v980
    %1208 = vmatpush1.bf16.msra.mxu0 %v979
    %1209 = vmatprep.subr.bf16.mxu0 %v984
    %1210 = vmatpush1.bf16.msra.mxu0 %v983
    %1211 = vmatprep.mubr.bf16.mxu0 %v386
    %1212 = vmatmul.mubr.bf16.gmra.mrb[0].mxu0 %v385
    %v1213 = vpop.f32.mrb[0].mxu0
    %v1214 = vadd.f32 %v522, %v1213
    %v1215 = vpop.f32.mrb[0].mxu0
    %v1216 = vadd.f32 %v526, %v1215
    %v1217 = vpop.f32.mrb[0].mxu0
    %v1218 = vpop.f32.mrb[0].mxu0
    %1219 = vdwg.mxu0
    %1220 = vmatprep.subr.bf16.mxu0 %v988
    %1221 = vmatpush1.bf16.msra.mxu0 %v987
    %1222 = vmatprep.subr.bf16.mxu0 %v992
    %1223 = vmatpush1.bf16.msra.mxu0 %v991
    %1224 = vmatprep.subr.bf16.mxu0 %v996
    %1225 = vmatpush1.bf16.msra.mxu0 %v995
    %1226 = vmatprep.subr.bf16.mxu0 %v1000
    %1227 = vmatpush1.bf16.msra.mxu0 %v999
    %1228 = vmatprep.subr.bf16.mxu0 %v1004
    %1229 = vmatpush1.bf16.msra.mxu0 %v1003
    %1230 = vmatprep.subr.bf16.mxu0 %v1008
    %1231 = vmatpush1.bf16.msra.mxu0 %v1007
    %1232 = vmatprep.subr.bf16.mxu0 %v1012
    %1233 = vmatpush1.bf16.msra.mxu0 %v1011
    %1234 = vmatprep.subr.bf16.mxu0 %v1016
    %1235 = vmatpush1.bf16.msra.mxu0 %v1015
    %1236 = vmatprep.subr.bf16.mxu0 %v1020
    %1237 = vmatpush1.bf16.msra.mxu0 %v1019
    %1238 = vmatprep.subr.bf16.mxu0 %v1024
    %1239 = vmatpush1.bf16.msra.mxu0 %v1023
    %1240 = vmatprep.subr.bf16.mxu0 %v1028
    %1241 = vmatpush1.bf16.msra.mxu0 %v1027
    %1242 = vmatprep.subr.bf16.mxu0 %v1032
    %1243 = vmatpush1.bf16.msra.mxu0 %v1031
    %1244 = vmatprep.subr.bf16.mxu0 %v1036
    %1245 = vmatpush1.bf16.msra.mxu0 %v1035
    %1246 = vmatprep.subr.bf16.mxu0 %v1040
    %1247 = vmatpush1.bf16.msra.mxu0 %v1039
    %1248 = vmatprep.subr.bf16.mxu0 %v1044
    %1249 = vmatpush1.bf16.msra.mxu0 %v1043
    %1250 = vmatprep.subr.bf16.mxu0 %v1048
    %1251 = vmatpush1.bf16.msra.mxu0 %v1047
    %1252 = vmatprep.mubr.bf16.mxu0 %v388
    %1253 = vmatmul.mubr.bf16.gmra.mrb[0].mxu0 %v387
    %v1254 = vpop.f32.mrb[0].mxu0
    %v1255 = vadd.f32 %v1214, %v1254
    %v1256 = vpop.f32.mrb[0].mxu0
    %v1257 = vadd.f32 %v1216, %v1256
    %v1258 = vpop.f32.mrb[0].mxu0
    %v1259 = vpop.f32.mrb[0].mxu0
    %1260 = vdwg.mxu0
    %1261 = vmatprep.subr.bf16.mxu0 %v926
    %1262 = vmatpush1.bf16.msra.mxu0 %v925
    %1263 = vmatprep.subr.bf16.mxu0 %v930
    %1264 = vmatpush1.bf16.msra.mxu0 %v929
    %1265 = vmatprep.subr.bf16.mxu0 %v934
    %1266 = vmatpush1.bf16.msra.mxu0 %v933
    %1267 = vmatprep.subr.bf16.mxu0 %v938
    %1268 = vmatpush1.bf16.msra.mxu0 %v937
    %1269 = vmatprep.subr.bf16.mxu0 %v942
    %1270 = vmatpush1.bf16.msra.mxu0 %v941
    %1271 = vmatprep.subr.bf16.mxu0 %v946
    %1272 = vmatpush1.bf16.msra.mxu0 %v945
    %1273 = vmatprep.subr.bf16.mxu0 %v950
    %1274 = vmatpush1.bf16.msra.mxu0 %v949
    %1275 = vmatprep.subr.bf16.mxu0 %v954
    %1276 = vmatpush1.bf16.msra.mxu0 %v953
    %1277 = vmatprep.subr.bf16.mxu0 %v958
    %1278 = vmatpush1.bf16.msra.mxu0 %v957
    %1279 = vmatprep.subr.bf16.mxu0 %v962
    %1280 = vmatpush1.bf16.msra.mxu0 %v961
    %1281 = vmatprep.subr.bf16.mxu0 %v966
    %1282 = vmatpush1.bf16.msra.mxu0 %v965
    %1283 = vmatprep.subr.bf16.mxu0 %v970
    %1284 = vmatpush1.bf16.msra.mxu0 %v969
    %1285 = vmatprep.subr.bf16.mxu0 %v974
    %1286 = vmatpush1.bf16.msra.mxu0 %v973
    %1287 = vmatprep.subr.bf16.mxu0 %v978
    %1288 = vmatpush1.bf16.msra.mxu0 %v977
    %1289 = vmatprep.subr.bf16.mxu0 %v982
    %1290 = vmatpush1.bf16.msra.mxu0 %v981
    %1291 = vmatprep.subr.bf16.mxu0 %v986
    %1292 = vmatpush1.bf16.msra.mxu0 %v985
    %1293 = vmatprep.mubr.bf16.mxu0 %v386
    %1294 = vmatmul.mubr.bf16.gmra.mrb[0].mxu0 %v385
    %v1295 = vpop.f32.mrb[0].mxu0
    %v1296 = vadd.f32 %v530, %v1295
    %v1297 = vpop.f32.mrb[0].mxu0
    %v1298 = vadd.f32 %v534, %v1297
    %v1299 = vpop.f32.mrb[0].mxu0
    %v1300 = vpop.f32.mrb[0].mxu0
    %1301 = vdwg.mxu0
    %1302 = vmatprep.subr.bf16.mxu0 %v990
    %1303 = vmatpush1.bf16.msra.mxu0 %v989
    %1304 = vmatprep.subr.bf16.mxu0 %v994
    %1305 = vmatpush1.bf16.msra.mxu0 %v993
    %1306 = vmatprep.subr.bf16.mxu0 %v998
    %1307 = vmatpush1.bf16.msra.mxu0 %v997
    %1308 = vmatprep.subr.bf16.mxu0 %v1002
    %1309 = vmatpush1.bf16.msra.mxu0 %v1001
    %1310 = vmatprep.subr.bf16.mxu0 %v1006
    %1311 = vmatpush1.bf16.msra.mxu0 %v1005
    %1312 = vmatprep.subr.bf16.mxu0 %v1010
    %1313 = vmatpush1.bf16.msra.mxu0 %v1009
    %1314 = vmatprep.subr.bf16.mxu0 %v1014
    %1315 = vmatpush1.bf16.msra.mxu0 %v1013
    %1316 = vmatprep.subr.bf16.mxu0 %v1018
    %1317 = vmatpush1.bf16.msra.mxu0 %v1017
    %1318 = vmatprep.subr.bf16.mxu0 %v1022
    %1319 = vmatpush1.bf16.msra.mxu0 %v1021
    %1320 = vmatprep.subr.bf16.mxu0 %v1026
    %1321 = vmatpush1.bf16.msra.mxu0 %v1025
    %1322 = vmatprep.subr.bf16.mxu0 %v1030
    %1323 = vmatpush1.bf16.msra.mxu0 %v1029
    %1324 = vmatprep.subr.bf16.mxu0 %v1034
    %1325 = vmatpush1.bf16.msra.mxu0 %v1033
    %1326 = vmatprep.subr.bf16.mxu0 %v1038
    %1327 = vmatpush1.bf16.msra.mxu0 %v1037
    %1328 = vmatprep.subr.bf16.mxu0 %v1042
    %1329 = vmatpush1.bf16.msra.mxu0 %v1041
    %1330 = vmatprep.subr.bf16.mxu0 %v1046
    %1331 = vmatpush1.bf16.msra.mxu0 %v1045
    %1332 = vmatprep.subr.bf16.mxu0 %v1050
    %1333 = vmatpush1.bf16.msra.mxu0 %v1049
    %1334 = vmatprep.mubr.bf16.mxu0 %v388
    %1335 = vmatmul.mubr.bf16.gmra.mrb[0].mxu0 %v387
    %v1336 = vpop.f32.mrb[0].mxu0
    %v1337 = vadd.f32 %v1296, %v1336
    %v1338 = vpop.f32.mrb[0].mxu0
    %v1339 = vadd.f32 %v1298, %v1338
    %v1340 = vpop.f32.mrb[0].mxu0
    %v1341 = vpop.f32.mrb[0].mxu0
    %1342 = vdwg.mxu0
    %v1343 = vmax.f32 %v1255, 0.0
    %v1344 = vmax.f32 %v1257, 0.0
    %v1345 = vmax.f32 %v1337, 0.0
    %v1346 = vmax.f32 %v1339, 0.0
    %v1347 = vpack.c.bf16 %v381, %v381
    %v1348 = vpack.c.bf16 %v382, %v382
    %v1349 = vpack.c.bf16 %v383, %v383
    %v1350 = vpack.c.bf16 %v384, %v384
    %v1351 = vld [vmem:[#allocation5] sm:$0xff]
    %v1352 = vld [vmem:[#allocation5 + $0x8] sm:$0xff]
    %v1353 = vld [vmem:[#allocation5 + $0x10] sm:$0xff]
    %v1354 = vld [vmem:[#allocation5 + $0x18] sm:$0xff]
    %v1355 = vld [vmem:[#allocation5 + $0x20] sm:$0xff]
    %v1356 = vld [vmem:[#allocation5 + $0x28] sm:$0xff]
    %v1357 = vld [vmem:[#allocation5 + $0x30] sm:$0xff]
    %v1358 = vld [vmem:[#allocation5 + $0x38] sm:$0xff]
    %v1359 = vld [vmem:[#allocation5 + $0x40] sm:$0xff]
    %v1360 = vld [vmem:[#allocation5 + $0x48] sm:$0xff]
    %v1361 = vld [vmem:[#allocation5 + $0x50] sm:$0xff]
    %v1362 = vld [vmem:[#allocation5 + $0x58] sm:$0xff]
    %v1363 = vld [vmem:[#allocation5 + $0x60] sm:$0xff]
    %v1364 = vld [vmem:[#allocation5 + $0x68] sm:$0xff]
    %v1365 = vld [vmem:[#allocation5 + $0x70] sm:$0xff]
    %v1366 = vld [vmem:[#allocation5 + $0x78] sm:$0xff]
    %v1367 = vld [vmem:[#allocation5 + $0x80] sm:$0xff]
    %v1368 = vld [vmem:[#allocation5 + $0x88] sm:$0xff]
    %v1369 = vld [vmem:[#allocation5 + $0x90] sm:$0xff]
    %v1370 = vld [vmem:[#allocation5 + $0x98] sm:$0xff]
    %v1371 = vld [vmem:[#allocation5 + $0xa0] sm:$0xff]
    %v1372 = vld [vmem:[#allocation5 + $0xa8] sm:$0xff]
    %v1373 = vld [vmem:[#allocation5 + $0xb0] sm:$0xff]
    %v1374 = vld [vmem:[#allocation5 + $0xb8] sm:$0xff]
    %v1375 = vld [vmem:[#allocation5 + $0xc0] sm:$0xff]
    %v1376 = vld [vmem:[#allocation5 + $0xc8] sm:$0xff]
    %v1377 = vld [vmem:[#allocation5 + $0xd0] sm:$0xff]
    %v1378 = vld [vmem:[#allocation5 + $0xd8] sm:$0xff]
    %v1379 = vld [vmem:[#allocation5 + $0xe0] sm:$0xff]
    %v1380 = vld [vmem:[#allocation5 + $0xe8] sm:$0xff]
    %v1381 = vld [vmem:[#allocation5 + $0xf0] sm:$0xff]
    %v1382 = vld [vmem:[#allocation5 + $0xf8] sm:$0xff]
    %v1383 = vld [vmem:[#allocation5 + $0x100] sm:$0xff]
    %v1384 = vld [vmem:[#allocation5 + $0x108] sm:$0xff]
    %v1385 = vld [vmem:[#allocation5 + $0x110] sm:$0xff]
    %v1386 = vld [vmem:[#allocation5 + $0x118] sm:$0xff]
    %v1387 = vld [vmem:[#allocation5 + $0x120] sm:$0xff]
    %v1388 = vld [vmem:[#allocation5 + $0x128] sm:$0xff]
    %v1389 = vld [vmem:[#allocation5 + $0x130] sm:$0xff]
    %v1390 = vld [vmem:[#allocation5 + $0x138] sm:$0xff]
    %v1391 = vld [vmem:[#allocation5 + $0x140] sm:$0xff]
    %v1392 = vld [vmem:[#allocation5 + $0x148] sm:$0xff]
    %v1393 = vld [vmem:[#allocation5 + $0x150] sm:$0xff]
    %v1394 = vld [vmem:[#allocation5 + $0x158] sm:$0xff]
    %v1395 = vld [vmem:[#allocation5 + $0x160] sm:$0xff]
    %v1396 = vld [vmem:[#allocation5 + $0x168] sm:$0xff]
    %v1397 = vld [vmem:[#allocation5 + $0x170] sm:$0xff]
    %v1398 = vld [vmem:[#allocation5 + $0x178] sm:$0xff]
    %v1399 = vld [vmem:[#allocation5 + $0x180] sm:$0xff]
    %v1400 = vld [vmem:[#allocation5 + $0x188] sm:$0xff]
    %v1401 = vld [vmem:[#allocation5 + $0x190] sm:$0xff]
    %v1402 = vld [vmem:[#allocation5 + $0x198] sm:$0xff]
    %v1403 = vld [vmem:[#allocation5 + $0x1a0] sm:$0xff]
    %v1404 = vld [vmem:[#allocation5 + $0x1a8] sm:$0xff]
    %v1405 = vld [vmem:[#allocation5 + $0x1b0] sm:$0xff]
    %v1406 = vld [vmem:[#allocation5 + $0x1b8] sm:$0xff]
    %v1407 = vld [vmem:[#allocation5 + $0x1c0] sm:$0xff]
    %v1408 = vld [vmem:[#allocation5 + $0x1c8] sm:$0xff]
    %v1409 = vld [vmem:[#allocation5 + $0x1d0] sm:$0xff]
    %v1410 = vld [vmem:[#allocation5 + $0x1d8] sm:$0xff]
    %v1411 = vld [vmem:[#allocation5 + $0x1e0] sm:$0xff]
    %v1412 = vld [vmem:[#allocation5 + $0x1e8] sm:$0xff]
    %v1413 = vld [vmem:[#allocation5 + $0x1f0] sm:$0xff]
    %v1414 = vld [vmem:[#allocation5 + $0x1f8] sm:$0xff]
    %v1415 = vld [vmem:[#allocation5 + $0x200] sm:$0xff]
    %v1416 = vld [vmem:[#allocation5 + $0x208] sm:$0xff]
    %v1417 = vld [vmem:[#allocation5 + $0x210] sm:$0xff]
    %v1418 = vld [vmem:[#allocation5 + $0x218] sm:$0xff]
    %v1419 = vld [vmem:[#allocation5 + $0x220] sm:$0xff]
    %v1420 = vld [vmem:[#allocation5 + $0x228] sm:$0xff]
    %v1421 = vld [vmem:[#allocation5 + $0x230] sm:$0xff]
    %v1422 = vld [vmem:[#allocation5 + $0x238] sm:$0xff]
    %v1423 = vld [vmem:[#allocation5 + $0x240] sm:$0xff]
    %v1424 = vld [vmem:[#allocation5 + $0x248] sm:$0xff]
    %v1425 = vld [vmem:[#allocation5 + $0x250] sm:$0xff]
    %v1426 = vld [vmem:[#allocation5 + $0x258] sm:$0xff]
    %v1427 = vld [vmem:[#allocation5 + $0x260] sm:$0xff]
    %v1428 = vld [vmem:[#allocation5 + $0x268] sm:$0xff]
    %v1429 = vld [vmem:[#allocation5 + $0x270] sm:$0xff]
    %v1430 = vld [vmem:[#allocation5 + $0x278] sm:$0xff]
    %v1431 = vld [vmem:[#allocation5 + $0x280] sm:$0xff]
    %v1432 = vld [vmem:[#allocation5 + $0x288] sm:$0xff]
    %v1433 = vld [vmem:[#allocation5 + $0x290] sm:$0xff]
    %v1434 = vld [vmem:[#allocation5 + $0x298] sm:$0xff]
    %v1435 = vld [vmem:[#allocation5 + $0x2a0] sm:$0xff]
    %v1436 = vld [vmem:[#allocation5 + $0x2a8] sm:$0xff]
    %v1437 = vld [vmem:[#allocation5 + $0x2b0] sm:$0xff]
    %v1438 = vld [vmem:[#allocation5 + $0x2b8] sm:$0xff]
    %v1439 = vld [vmem:[#allocation5 + $0x2c0] sm:$0xff]
    %v1440 = vld [vmem:[#allocation5 + $0x2c8] sm:$0xff]
    %v1441 = vld [vmem:[#allocation5 + $0x2d0] sm:$0xff]
    %v1442 = vld [vmem:[#allocation5 + $0x2d8] sm:$0xff]
    %v1443 = vld [vmem:[#allocation5 + $0x2e0] sm:$0xff]
    %v1444 = vld [vmem:[#allocation5 + $0x2e8] sm:$0xff]
    %v1445 = vld [vmem:[#allocation5 + $0x2f0] sm:$0xff]
    %v1446 = vld [vmem:[#allocation5 + $0x2f8] sm:$0xff]
    %v1447 = vld [vmem:[#allocation5 + $0x300] sm:$0xff]
    %v1448 = vld [vmem:[#allocation5 + $0x308] sm:$0xff]
    %v1449 = vld [vmem:[#allocation5 + $0x310] sm:$0xff]
    %v1450 = vld [vmem:[#allocation5 + $0x318] sm:$0xff]
    %v1451 = vld [vmem:[#allocation5 + $0x320] sm:$0xff]
    %v1452 = vld [vmem:[#allocation5 + $0x328] sm:$0xff]
    %v1453 = vld [vmem:[#allocation5 + $0x330] sm:$0xff]
    %v1454 = vld [vmem:[#allocation5 + $0x338] sm:$0xff]
    %v1455 = vld [vmem:[#allocation5 + $0x340] sm:$0xff]
    %v1456 = vld [vmem:[#allocation5 + $0x348] sm:$0xff]
    %v1457 = vld [vmem:[#allocation5 + $0x350] sm:$0xff]
    %v1458 = vld [vmem:[#allocation5 + $0x358] sm:$0xff]
    %v1459 = vld [vmem:[#allocation5 + $0x360] sm:$0xff]
    %v1460 = vld [vmem:[#allocation5 + $0x368] sm:$0xff]
    %v1461 = vld [vmem:[#allocation5 + $0x370] sm:$0xff]
    %v1462 = vld [vmem:[#allocation5 + $0x378] sm:$0xff]
    %v1463 = vld [vmem:[#allocation5 + $0x380] sm:$0xff]
    %v1464 = vld [vmem:[#allocation5 + $0x388] sm:$0xff]
    %v1465 = vld [vmem:[#allocation5 + $0x390] sm:$0xff]
    %v1466 = vld [vmem:[#allocation5 + $0x398] sm:$0xff]
    %v1467 = vld [vmem:[#allocation5 + $0x3a0] sm:$0xff]
    %v1468 = vld [vmem:[#allocation5 + $0x3a8] sm:$0xff]
    %v1469 = vld [vmem:[#allocation5 + $0x3b0] sm:$0xff]
    %v1470 = vld [vmem:[#allocation5 + $0x3b8] sm:$0xff]
    %v1471 = vld [vmem:[#allocation5 + $0x3c0] sm:$0xff]
    %v1472 = vld [vmem:[#allocation5 + $0x3c8] sm:$0xff]
    %v1473 = vld [vmem:[#allocation5 + $0x3d0] sm:$0xff]
    %v1474 = vld [vmem:[#allocation5 + $0x3d8] sm:$0xff]
    %v1475 = vld [vmem:[#allocation5 + $0x3e0] sm:$0xff]
    %v1476 = vld [vmem:[#allocation5 + $0x3e8] sm:$0xff]
    %v1477 = vld [vmem:[#allocation5 + $0x3f0] sm:$0xff]
    %v1478 = vld [vmem:[#allocation5 + $0x3f8] sm:$0xff]
    %v1479 = vld [vmem:[%s7] sm:$0xf]
    %v1481 = vlaneseq
    %v1482 = vshrl.u32 %v1481, 7
    %v1483 = vsub.s32 0, %v1482
    %v1484 = vrot.slane %v1479, %v1483
    %v1485 = vlaneseq
    %v1486 = vshrl.u32 %v1485, 7
    %v1487 = vsub.s32 1, %v1486
    %v1488 = vrot.slane %v1479, %v1487
    %v1489 = vlaneseq
    %v1490 = vshrl.u32 %v1489, 7
    %v1491 = vsub.s32 2, %v1490
    %v1492 = vrot.slane %v1479, %v1491
    %v1493 = vlaneseq
    %v1494 = vshrl.u32 %v1493, 7
    %v1495 = vsub.s32 3, %v1494
    %v1496 = vrot.slane %v1479, %v1495
    %v1629 = vunpack.c.l.b16 %v1351
    %v1630 = vunpack.c.h.b16 %v1351
    %v1631 = vunpack.c.l.b16 %v1352
    %v1632 = vunpack.c.h.b16 %v1352
    %v1633 = vunpack.c.l.b16 %v1353
    %v1634 = vunpack.c.h.b16 %v1353
    %v1635 = vunpack.c.l.b16 %v1354
    %v1636 = vunpack.c.h.b16 %v1354
    %v1637 = vunpack.c.l.b16 %v1355
    %v1638 = vunpack.c.h.b16 %v1355
    %v1639 = vunpack.c.l.b16 %v1356
    %v1640 = vunpack.c.h.b16 %v1356
    %v1641 = vunpack.c.l.b16 %v1357
    %v1642 = vunpack.c.h.b16 %v1357
    %v1643 = vunpack.c.l.b16 %v1358
    %v1644 = vunpack.c.h.b16 %v1358
    %v1645 = vunpack.c.l.b16 %v1359
    %v1646 = vunpack.c.h.b16 %v1359
    %v1647 = vunpack.c.l.b16 %v1360
    %v1648 = vunpack.c.h.b16 %v1360
    %v1649 = vunpack.c.l.b16 %v1361
    %v1650 = vunpack.c.h.b16 %v1361
    %v1651 = vunpack.c.l.b16 %v1362
    %v1652 = vunpack.c.h.b16 %v1362
    %v1653 = vunpack.c.l.b16 %v1363
    %v1654 = vunpack.c.h.b16 %v1363
    %v1655 = vunpack.c.l.b16 %v1364
    %v1656 = vunpack.c.h.b16 %v1364
    %v1657 = vunpack.c.l.b16 %v1365
    %v1658 = vunpack.c.h.b16 %v1365
    %v1659 = vunpack.c.l.b16 %v1366
    %v1660 = vunpack.c.h.b16 %v1366
    %v1661 = vunpack.c.l.b16 %v1367
    %v1662 = vunpack.c.h.b16 %v1367
    %v1663 = vunpack.c.l.b16 %v1368
    %v1664 = vunpack.c.h.b16 %v1368
    %v1665 = vunpack.c.l.b16 %v1369
    %v1666 = vunpack.c.h.b16 %v1369
    %v1667 = vunpack.c.l.b16 %v1370
    %v1668 = vunpack.c.h.b16 %v1370
    %v1669 = vunpack.c.l.b16 %v1371
    %v1670 = vunpack.c.h.b16 %v1371
    %v1671 = vunpack.c.l.b16 %v1372
    %v1672 = vunpack.c.h.b16 %v1372
    %v1673 = vunpack.c.l.b16 %v1373
    %v1674 = vunpack.c.h.b16 %v1373
    %v1675 = vunpack.c.l.b16 %v1374
    %v1676 = vunpack.c.h.b16 %v1374
    %v1677 = vunpack.c.l.b16 %v1375
    %v1678 = vunpack.c.h.b16 %v1375
    %v1679 = vunpack.c.l.b16 %v1376
    %v1680 = vunpack.c.h.b16 %v1376
    %v1681 = vunpack.c.l.b16 %v1377
    %v1682 = vunpack.c.h.b16 %v1377
    %v1683 = vunpack.c.l.b16 %v1378
    %v1684 = vunpack.c.h.b16 %v1378
    %v1685 = vunpack.c.l.b16 %v1379
    %v1686 = vunpack.c.h.b16 %v1379
    %v1687 = vunpack.c.l.b16 %v1380
    %v1688 = vunpack.c.h.b16 %v1380
    %v1689 = vunpack.c.l.b16 %v1381
    %v1690 = vunpack.c.h.b16 %v1381
    %v1691 = vunpack.c.l.b16 %v1382
    %v1692 = vunpack.c.h.b16 %v1382
    %v1693 = vunpack.c.l.b16 %v1383
    %v1694 = vunpack.c.h.b16 %v1383
    %v1695 = vunpack.c.l.b16 %v1384
    %v1696 = vunpack.c.h.b16 %v1384
    %v1697 = vunpack.c.l.b16 %v1385
    %v1698 = vunpack.c.h.b16 %v1385
    %v1699 = vunpack.c.l.b16 %v1386
    %v1700 = vunpack.c.h.b16 %v1386
    %v1701 = vunpack.c.l.b16 %v1387
    %v1702 = vunpack.c.h.b16 %v1387
    %v1703 = vunpack.c.l.b16 %v1388
    %v1704 = vunpack.c.h.b16 %v1388
    %v1705 = vunpack.c.l.b16 %v1389
    %v1706 = vunpack.c.h.b16 %v1389
    %v1707 = vunpack.c.l.b16 %v1390
    %v1708 = vunpack.c.h.b16 %v1390
    %v1709 = vunpack.c.l.b16 %v1391
    %v1710 = vunpack.c.h.b16 %v1391
    %v1711 = vunpack.c.l.b16 %v1392
    %v1712 = vunpack.c.h.b16 %v1392
    %v1713 = vunpack.c.l.b16 %v1393
    %v1714 = vunpack.c.h.b16 %v1393
    %v1715 = vunpack.c.l.b16 %v1394
    %v1716 = vunpack.c.h.b16 %v1394
    %v1717 = vunpack.c.l.b16 %v1395
    %v1718 = vunpack.c.h.b16 %v1395
    %v1719 = vunpack.c.l.b16 %v1396
    %v1720 = vunpack.c.h.b16 %v1396
    %v1721 = vunpack.c.l.b16 %v1397
    %v1722 = vunpack.c.h.b16 %v1397
    %v1723 = vunpack.c.l.b16 %v1398
    %v1724 = vunpack.c.h.b16 %v1398
    %v1725 = vunpack.c.l.b16 %v1399
    %v1726 = vunpack.c.h.b16 %v1399
    %v1727 = vunpack.c.l.b16 %v1400
    %v1728 = vunpack.c.h.b16 %v1400
    %v1729 = vunpack.c.l.b16 %v1401
    %v1730 = vunpack.c.h.b16 %v1401
    %v1731 = vunpack.c.l.b16 %v1402
    %v1732 = vunpack.c.h.b16 %v1402
    %v1733 = vunpack.c.l.b16 %v1403
    %v1734 = vunpack.c.h.b16 %v1403
    %v1735 = vunpack.c.l.b16 %v1404
    %v1736 = vunpack.c.h.b16 %v1404
    %v1737 = vunpack.c.l.b16 %v1405
    %v1738 = vunpack.c.h.b16 %v1405
    %v1739 = vunpack.c.l.b16 %v1406
    %v1740 = vunpack.c.h.b16 %v1406
    %v1741 = vunpack.c.l.b16 %v1407
    %v1742 = vunpack.c.h.b16 %v1407
    %v1743 = vunpack.c.l.b16 %v1408
    %v1744 = vunpack.c.h.b16 %v1408
    %v1745 = vunpack.c.l.b16 %v1409
    %v1746 = vunpack.c.h.b16 %v1409
    %v1747 = vunpack.c.l.b16 %v1410
    %v1748 = vunpack.c.h.b16 %v1410
    %v1749 = vunpack.c.l.b16 %v1411
    %v1750 = vunpack.c.h.b16 %v1411
    %v1751 = vunpack.c.l.b16 %v1412
    %v1752 = vunpack.c.h.b16 %v1412
    %v1753 = vunpack.c.l.b16 %v1413
    %v1754 = vunpack.c.h.b16 %v1413
    %v1755 = vunpack.c.l.b16 %v1414
    %v1756 = vunpack.c.h.b16 %v1414
    %v1757 = vunpack.c.l.b16 %v1415
    %v1758 = vunpack.c.h.b16 %v1415
    %v1759 = vunpack.c.l.b16 %v1416
    %v1760 = vunpack.c.h.b16 %v1416
    %v1761 = vunpack.c.l.b16 %v1417
    %v1762 = vunpack.c.h.b16 %v1417
    %v1763 = vunpack.c.l.b16 %v1418
    %v1764 = vunpack.c.h.b16 %v1418
    %v1765 = vunpack.c.l.b16 %v1419
    %v1766 = vunpack.c.h.b16 %v1419
    %v1767 = vunpack.c.l.b16 %v1420
    %v1768 = vunpack.c.h.b16 %v1420
    %v1769 = vunpack.c.l.b16 %v1421
    %v1770 = vunpack.c.h.b16 %v1421
    %v1771 = vunpack.c.l.b16 %v1422
    %v1772 = vunpack.c.h.b16 %v1422
    %v1773 = vunpack.c.l.b16 %v1423
    %v1774 = vunpack.c.h.b16 %v1423
    %v1775 = vunpack.c.l.b16 %v1424
    %v1776 = vunpack.c.h.b16 %v1424
    %v1777 = vunpack.c.l.b16 %v1425
    %v1778 = vunpack.c.h.b16 %v1425
    %v1779 = vunpack.c.l.b16 %v1426
    %v1780 = vunpack.c.h.b16 %v1426
    %v1781 = vunpack.c.l.b16 %v1427
    %v1782 = vunpack.c.h.b16 %v1427
    %v1783 = vunpack.c.l.b16 %v1428
    %v1784 = vunpack.c.h.b16 %v1428
    %v1785 = vunpack.c.l.b16 %v1429
    %v1786 = vunpack.c.h.b16 %v1429
    %v1787 = vunpack.c.l.b16 %v1430
    %v1788 = vunpack.c.h.b16 %v1430
    %v1789 = vunpack.c.l.b16 %v1431
    %v1790 = vunpack.c.h.b16 %v1431
    %v1791 = vunpack.c.l.b16 %v1432
    %v1792 = vunpack.c.h.b16 %v1432
    %v1793 = vunpack.c.l.b16 %v1433
    %v1794 = vunpack.c.h.b16 %v1433
    %v1795 = vunpack.c.l.b16 %v1434
    %v1796 = vunpack.c.h.b16 %v1434
    %v1797 = vunpack.c.l.b16 %v1435
    %v1798 = vunpack.c.h.b16 %v1435
    %v1799 = vunpack.c.l.b16 %v1436
    %v1800 = vunpack.c.h.b16 %v1436
    %v1801 = vunpack.c.l.b16 %v1437
    %v1802 = vunpack.c.h.b16 %v1437
    %v1803 = vunpack.c.l.b16 %v1438
    %v1804 = vunpack.c.h.b16 %v1438
    %v1805 = vunpack.c.l.b16 %v1439
    %v1806 = vunpack.c.h.b16 %v1439
    %v1807 = vunpack.c.l.b16 %v1440
    %v1808 = vunpack.c.h.b16 %v1440
    %v1809 = vunpack.c.l.b16 %v1441
    %v1810 = vunpack.c.h.b16 %v1441
    %v1811 = vunpack.c.l.b16 %v1442
    %v1812 = vunpack.c.h.b16 %v1442
    %v1813 = vunpack.c.l.b16 %v1443
    %v1814 = vunpack.c.h.b16 %v1443
    %v1815 = vunpack.c.l.b16 %v1444
    %v1816 = vunpack.c.h.b16 %v1444
    %v1817 = vunpack.c.l.b16 %v1445
    %v1818 = vunpack.c.h.b16 %v1445
    %v1819 = vunpack.c.l.b16 %v1446
    %v1820 = vunpack.c.h.b16 %v1446
    %v1821 = vunpack.c.l.b16 %v1447
    %v1822 = vunpack.c.h.b16 %v1447
    %v1823 = vunpack.c.l.b16 %v1448
    %v1824 = vunpack.c.h.b16 %v1448
    %v1825 = vunpack.c.l.b16 %v1449
    %v1826 = vunpack.c.h.b16 %v1449
    %v1827 = vunpack.c.l.b16 %v1450
    %v1828 = vunpack.c.h.b16 %v1450
    %v1829 = vunpack.c.l.b16 %v1451
    %v1830 = vunpack.c.h.b16 %v1451
    %v1831 = vunpack.c.l.b16 %v1452
    %v1832 = vunpack.c.h.b16 %v1452
    %v1833 = vunpack.c.l.b16 %v1453
    %v1834 = vunpack.c.h.b16 %v1453
    %v1835 = vunpack.c.l.b16 %v1454
    %v1836 = vunpack.c.h.b16 %v1454
    %v1837 = vunpack.c.l.b16 %v1455
    %v1838 = vunpack.c.h.b16 %v1455
    %v1839 = vunpack.c.l.b16 %v1456
    %v1840 = vunpack.c.h.b16 %v1456
    %v1841 = vunpack.c.l.b16 %v1457
    %v1842 = vunpack.c.h.b16 %v1457
    %v1843 = vunpack.c.l.b16 %v1458
    %v1844 = vunpack.c.h.b16 %v1458
    %v1845 = vunpack.c.l.b16 %v1459
    %v1846 = vunpack.c.h.b16 %v1459
    %v1847 = vunpack.c.l.b16 %v1460
    %v1848 = vunpack.c.h.b16 %v1460
    %v1849 = vunpack.c.l.b16 %v1461
    %v1850 = vunpack.c.h.b16 %v1461
    %v1851 = vunpack.c.l.b16 %v1462
    %v1852 = vunpack.c.h.b16 %v1462
    %v1853 = vunpack.c.l.b16 %v1463
    %v1854 = vunpack.c.h.b16 %v1463
    %v1855 = vunpack.c.l.b16 %v1464
    %v1856 = vunpack.c.h.b16 %v1464
    %v1857 = vunpack.c.l.b16 %v1465
    %v1858 = vunpack.c.h.b16 %v1465
    %v1859 = vunpack.c.l.b16 %v1466
    %v1860 = vunpack.c.h.b16 %v1466
    %v1861 = vunpack.c.l.b16 %v1467
    %v1862 = vunpack.c.h.b16 %v1467
    %v1863 = vunpack.c.l.b16 %v1468
    %v1864 = vunpack.c.h.b16 %v1468
    %v1865 = vunpack.c.l.b16 %v1469
    %v1866 = vunpack.c.h.b16 %v1469
    %v1867 = vunpack.c.l.b16 %v1470
    %v1868 = vunpack.c.h.b16 %v1470
    %v1869 = vunpack.c.l.b16 %v1471
    %v1870 = vunpack.c.h.b16 %v1471
    %v1871 = vunpack.c.l.b16 %v1472
    %v1872 = vunpack.c.h.b16 %v1472
    %v1873 = vunpack.c.l.b16 %v1473
    %v1874 = vunpack.c.h.b16 %v1473
    %v1875 = vunpack.c.l.b16 %v1474
    %v1876 = vunpack.c.h.b16 %v1474
    %v1877 = vunpack.c.l.b16 %v1475
    %v1878 = vunpack.c.h.b16 %v1475
    %v1879 = vunpack.c.l.b16 %v1476
    %v1880 = vunpack.c.h.b16 %v1476
    %v1881 = vunpack.c.l.b16 %v1477
    %v1882 = vunpack.c.h.b16 %v1477
    %v1883 = vunpack.c.l.b16 %v1478
    %v1884 = vunpack.c.h.b16 %v1478
    %v1885 = vpack.c.b16 %v1633, %v1629
    %v1886 = vpack.c.b16 %v1634, %v1630
    %v1887 = vpack.c.b16 %v1635, %v1631
    %v1888 = vpack.c.b16 %v1636, %v1632
    %v1889 = vpack.c.b16 %v1641, %v1637
    %v1890 = vpack.c.b16 %v1642, %v1638
    %v1891 = vpack.c.b16 %v1643, %v1639
    %v1892 = vpack.c.b16 %v1644, %v1640
    %v1893 = vpack.c.b16 %v1649, %v1645
    %v1894 = vpack.c.b16 %v1650, %v1646
    %v1895 = vpack.c.b16 %v1651, %v1647
    %v1896 = vpack.c.b16 %v1652, %v1648
    %v1897 = vpack.c.b16 %v1657, %v1653
    %v1898 = vpack.c.b16 %v1658, %v1654
    %v1899 = vpack.c.b16 %v1659, %v1655
    %v1900 = vpack.c.b16 %v1660, %v1656
    %v1901 = vpack.c.b16 %v1665, %v1661
    %v1902 = vpack.c.b16 %v1666, %v1662
    %v1903 = vpack.c.b16 %v1667, %v1663
    %v1904 = vpack.c.b16 %v1668, %v1664
    %v1905 = vpack.c.b16 %v1673, %v1669
    %v1906 = vpack.c.b16 %v1674, %v1670
    %v1907 = vpack.c.b16 %v1675, %v1671
    %v1908 = vpack.c.b16 %v1676, %v1672
    %v1909 = vpack.c.b16 %v1681, %v1677
    %v1910 = vpack.c.b16 %v1682, %v1678
    %v1911 = vpack.c.b16 %v1683, %v1679
    %v1912 = vpack.c.b16 %v1684, %v1680
    %v1913 = vpack.c.b16 %v1689, %v1685
    %v1914 = vpack.c.b16 %v1690, %v1686
    %v1915 = vpack.c.b16 %v1691, %v1687
    %v1916 = vpack.c.b16 %v1692, %v1688
    %v1917 = vpack.c.b16 %v1697, %v1693
    %v1918 = vpack.c.b16 %v1698, %v1694
    %v1919 = vpack.c.b16 %v1699, %v1695
    %v1920 = vpack.c.b16 %v1700, %v1696
    %v1921 = vpack.c.b16 %v1705, %v1701
    %v1922 = vpack.c.b16 %v1706, %v1702
    %v1923 = vpack.c.b16 %v1707, %v1703
    %v1924 = vpack.c.b16 %v1708, %v1704
    %v1925 = vpack.c.b16 %v1713, %v1709
    %v1926 = vpack.c.b16 %v1714, %v1710
    %v1927 = vpack.c.b16 %v1715, %v1711
    %v1928 = vpack.c.b16 %v1716, %v1712
    %v1929 = vpack.c.b16 %v1721, %v1717
    %v1930 = vpack.c.b16 %v1722, %v1718
    %v1931 = vpack.c.b16 %v1723, %v1719
    %v1932 = vpack.c.b16 %v1724, %v1720
    %v1933 = vpack.c.b16 %v1729, %v1725
    %v1934 = vpack.c.b16 %v1730, %v1726
    %v1935 = vpack.c.b16 %v1731, %v1727
    %v1936 = vpack.c.b16 %v1732, %v1728
    %v1937 = vpack.c.b16 %v1737, %v1733
    %v1938 = vpack.c.b16 %v1738, %v1734
    %v1939 = vpack.c.b16 %v1739, %v1735
    %v1940 = vpack.c.b16 %v1740, %v1736
    %v1941 = vpack.c.b16 %v1745, %v1741
    %v1942 = vpack.c.b16 %v1746, %v1742
    %v1943 = vpack.c.b16 %v1747, %v1743
    %v1944 = vpack.c.b16 %v1748, %v1744
    %v1945 = vpack.c.b16 %v1753, %v1749
    %v1946 = vpack.c.b16 %v1754, %v1750
    %v1947 = vpack.c.b16 %v1755, %v1751
    %v1948 = vpack.c.b16 %v1756, %v1752
    %v1949 = vpack.c.b16 %v1761, %v1757
    %v1950 = vpack.c.b16 %v1762, %v1758
    %v1951 = vpack.c.b16 %v1763, %v1759
    %v1952 = vpack.c.b16 %v1764, %v1760
    %v1953 = vpack.c.b16 %v1769, %v1765
    %v1954 = vpack.c.b16 %v1770, %v1766
    %v1955 = vpack.c.b16 %v1771, %v1767
    %v1956 = vpack.c.b16 %v1772, %v1768
    %v1957 = vpack.c.b16 %v1777, %v1773
    %v1958 = vpack.c.b16 %v1778, %v1774
    %v1959 = vpack.c.b16 %v1779, %v1775
    %v1960 = vpack.c.b16 %v1780, %v1776
    %v1961 = vpack.c.b16 %v1785, %v1781
    %v1962 = vpack.c.b16 %v1786, %v1782
    %v1963 = vpack.c.b16 %v1787, %v1783
    %v1964 = vpack.c.b16 %v1788, %v1784
    %v1965 = vpack.c.b16 %v1793, %v1789
    %v1966 = vpack.c.b16 %v1794, %v1790
    %v1967 = vpack.c.b16 %v1795, %v1791
    %v1968 = vpack.c.b16 %v1796, %v1792
    %v1969 = vpack.c.b16 %v1801, %v1797
    %v1970 = vpack.c.b16 %v1802, %v1798
    %v1971 = vpack.c.b16 %v1803, %v1799
    %v1972 = vpack.c.b16 %v1804, %v1800
    %v1973 = vpack.c.b16 %v1809, %v1805
    %v1974 = vpack.c.b16 %v1810, %v1806
    %v1975 = vpack.c.b16 %v1811, %v1807
    %v1976 = vpack.c.b16 %v1812, %v1808
    %v1977 = vpack.c.b16 %v1817, %v1813
    %v1978 = vpack.c.b16 %v1818, %v1814
    %v1979 = vpack.c.b16 %v1819, %v1815
    %v1980 = vpack.c.b16 %v1820, %v1816
    %v1981 = vpack.c.b16 %v1825, %v1821
    %v1982 = vpack.c.b16 %v1826, %v1822
    %v1983 = vpack.c.b16 %v1827, %v1823
    %v1984 = vpack.c.b16 %v1828, %v1824
    %v1985 = vpack.c.b16 %v1833, %v1829
    %v1986 = vpack.c.b16 %v1834, %v1830
    %v1987 = vpack.c.b16 %v1835, %v1831
    %v1988 = vpack.c.b16 %v1836, %v1832
    %v1989 = vpack.c.b16 %v1841, %v1837
    %v1990 = vpack.c.b16 %v1842, %v1838
    %v1991 = vpack.c.b16 %v1843, %v1839
    %v1992 = vpack.c.b16 %v1844, %v1840
    %v1993 = vpack.c.b16 %v1849, %v1845
    %v1994 = vpack.c.b16 %v1850, %v1846
    %v1995 = vpack.c.b16 %v1851, %v1847
    %v1996 = vpack.c.b16 %v1852, %v1848
    %v1997 = vpack.c.b16 %v1857, %v1853
    %v1998 = vpack.c.b16 %v1858, %v1854
    %v1999 = vpack.c.b16 %v1859, %v1855
    %v2000 = vpack.c.b16 %v1860, %v1856
    %v2001 = vpack.c.b16 %v1865, %v1861
    %v2002 = vpack.c.b16 %v1866, %v1862
    %v2003 = vpack.c.b16 %v1867, %v1863
    %v2004 = vpack.c.b16 %v1868, %v1864
    %v2005 = vpack.c.b16 %v1873, %v1869
    %v2006 = vpack.c.b16 %v1874, %v1870
    %v2007 = vpack.c.b16 %v1875, %v1871
    %v2008 = vpack.c.b16 %v1876, %v1872
    %v2009 = vpack.c.b16 %v1881, %v1877
    %v2010 = vpack.c.b16 %v1882, %v1878
    %v2011 = vpack.c.b16 %v1883, %v1879
    %v2012 = vpack.c.b16 %v1884, %v1880
    %2141 = vmatprep.subr.bf16.mxu0 %v1886
    %2142 = vmatpush1.bf16.msra.mxu0 %v1885
    %2143 = vmatprep.subr.bf16.mxu0 %v1890
    %2144 = vmatpush1.bf16.msra.mxu0 %v1889
    %2145 = vmatprep.subr.bf16.mxu0 %v1894
    %2146 = vmatpush1.bf16.msra.mxu0 %v1893
    %2147 = vmatprep.subr.bf16.mxu0 %v1898
    %2148 = vmatpush1.bf16.msra.mxu0 %v1897
    %2149 = vmatprep.subr.bf16.mxu0 %v1902
    %2150 = vmatpush1.bf16.msra.mxu0 %v1901
    %2151 = vmatprep.subr.bf16.mxu0 %v1906
    %2152 = vmatpush1.bf16.msra.mxu0 %v1905
    %2153 = vmatprep.subr.bf16.mxu0 %v1910
    %2154 = vmatpush1.bf16.msra.mxu0 %v1909
    %2155 = vmatprep.subr.bf16.mxu0 %v1914
    %2156 = vmatpush1.bf16.msra.mxu0 %v1913
    %2157 = vmatprep.subr.bf16.mxu0 %v1918
    %2158 = vmatpush1.bf16.msra.mxu0 %v1917
    %2159 = vmatprep.subr.bf16.mxu0 %v1922
    %2160 = vmatpush1.bf16.msra.mxu0 %v1921
    %2161 = vmatprep.subr.bf16.mxu0 %v1926
    %2162 = vmatpush1.bf16.msra.mxu0 %v1925
    %2163 = vmatprep.subr.bf16.mxu0 %v1930
    %2164 = vmatpush1.bf16.msra.mxu0 %v1929
    %2165 = vmatprep.subr.bf16.mxu0 %v1934
    %2166 = vmatpush1.bf16.msra.mxu0 %v1933
    %2167 = vmatprep.subr.bf16.mxu0 %v1938
    %2168 = vmatpush1.bf16.msra.mxu0 %v1937
    %2169 = vmatprep.subr.bf16.mxu0 %v1942
    %2170 = vmatpush1.bf16.msra.mxu0 %v1941
    %2171 = vmatprep.subr.bf16.mxu0 %v1946
    %2172 = vmatpush1.bf16.msra.mxu0 %v1945
    %2173 = vmatprep.mubr.bf16.mxu0 %v1348
    %2174 = vmatmul.mubr.bf16.gmra.mrb[0].mxu0 %v1347
    %v2175 = vpop.f32.mrb[0].mxu0
    %v2176 = vadd.f32 %v1484, %v2175
    %v2177 = vpop.f32.mrb[0].mxu0
    %v2178 = vadd.f32 %v1488, %v2177
    %v2179 = vpop.f32.mrb[0].mxu0
    %v2180 = vpop.f32.mrb[0].mxu0
    %2181 = vdwg.mxu0
    %2182 = vmatprep.subr.bf16.mxu0 %v1950
    %2183 = vmatpush1.bf16.msra.mxu0 %v1949
    %2184 = vmatprep.subr.bf16.mxu0 %v1954
    %2185 = vmatpush1.bf16.msra.mxu0 %v1953
    %2186 = vmatprep.subr.bf16.mxu0 %v1958
    %2187 = vmatpush1.bf16.msra.mxu0 %v1957
    %2188 = vmatprep.subr.bf16.mxu0 %v1962
    %2189 = vmatpush1.bf16.msra.mxu0 %v1961
    %2190 = vmatprep.subr.bf16.mxu0 %v1966
    %2191 = vmatpush1.bf16.msra.mxu0 %v1965
    %2192 = vmatprep.subr.bf16.mxu0 %v1970
    %2193 = vmatpush1.bf16.msra.mxu0 %v1969
    %2194 = vmatprep.subr.bf16.mxu0 %v1974
    %2195 = vmatpush1.bf16.msra.mxu0 %v1973
    %2196 = vmatprep.subr.bf16.mxu0 %v1978
    %2197 = vmatpush1.bf16.msra.mxu0 %v1977
    %2198 = vmatprep.subr.bf16.mxu0 %v1982
    %2199 = vmatpush1.bf16.msra.mxu0 %v1981
    %2200 = vmatprep.subr.bf16.mxu0 %v1986
    %2201 = vmatpush1.bf16.msra.mxu0 %v1985
    %2202 = vmatprep.subr.bf16.mxu0 %v1990
    %2203 = vmatpush1.bf16.msra.mxu0 %v1989
    %2204 = vmatprep.subr.bf16.mxu0 %v1994
    %2205 = vmatpush1.bf16.msra.mxu0 %v1993
    %2206 = vmatprep.subr.bf16.mxu0 %v1998
    %2207 = vmatpush1.bf16.msra.mxu0 %v1997
    %2208 = vmatprep.subr.bf16.mxu0 %v2002
    %2209 = vmatpush1.bf16.msra.mxu0 %v2001
    %2210 = vmatprep.subr.bf16.mxu0 %v2006
    %2211 = vmatpush1.bf16.msra.mxu0 %v2005
    %2212 = vmatprep.subr.bf16.mxu0 %v2010
    %2213 = vmatpush1.bf16.msra.mxu0 %v2009
    %2214 = vmatprep.mubr.bf16.mxu0 %v1350
    %2215 = vmatmul.mubr.bf16.gmra.mrb[0].mxu0 %v1349
    %v2216 = vpop.f32.mrb[0].mxu0
    %v2217 = vadd.f32 %v2176, %v2216
    %v2218 = vpop.f32.mrb[0].mxu0
    %v2219 = vadd.f32 %v2178, %v2218
    %v2220 = vpop.f32.mrb[0].mxu0
    %v2221 = vpop.f32.mrb[0].mxu0
    %2222 = vdwg.mxu0
    %2223 = vmatprep.subr.bf16.mxu0 %v1888
    %2224 = vmatpush1.bf16.msra.mxu0 %v1887
    %2225 = vmatprep.subr.bf16.mxu0 %v1892
    %2226 = vmatpush1.bf16.msra.mxu0 %v1891
    %2227 = vmatprep.subr.bf16.mxu0 %v1896
    %2228 = vmatpush1.bf16.msra.mxu0 %v1895
    %2229 = vmatprep.subr.bf16.mxu0 %v1900
    %2230 = vmatpush1.bf16.msra.mxu0 %v1899
    %2231 = vmatprep.subr.bf16.mxu0 %v1904
    %2232 = vmatpush1.bf16.msra.mxu0 %v1903
    %2233 = vmatprep.subr.bf16.mxu0 %v1908
    %2234 = vmatpush1.bf16.msra.mxu0 %v1907
    %2235 = vmatprep.subr.bf16.mxu0 %v1912
    %2236 = vmatpush1.bf16.msra.mxu0 %v1911
    %2237 = vmatprep.subr.bf16.mxu0 %v1916
    %2238 = vmatpush1.bf16.msra.mxu0 %v1915
    %2239 = vmatprep.subr.bf16.mxu0 %v1920
    %2240 = vmatpush1.bf16.msra.mxu0 %v1919
    %2241 = vmatprep.subr.bf16.mxu0 %v1924
    %2242 = vmatpush1.bf16.msra.mxu0 %v1923
    %2243 = vmatprep.subr.bf16.mxu0 %v1928
    %2244 = vmatpush1.bf16.msra.mxu0 %v1927
    %2245 = vmatprep.subr.bf16.mxu0 %v1932
    %2246 = vmatpush1.bf16.msra.mxu0 %v1931
    %2247 = vmatprep.subr.bf16.mxu0 %v1936
    %2248 = vmatpush1.bf16.msra.mxu0 %v1935
    %2249 = vmatprep.subr.bf16.mxu0 %v1940
    %2250 = vmatpush1.bf16.msra.mxu0 %v1939
    %2251 = vmatprep.subr.bf16.mxu0 %v1944
    %2252 = vmatpush1.bf16.msra.mxu0 %v1943
    %2253 = vmatprep.subr.bf16.mxu0 %v1948
    %2254 = vmatpush1.bf16.msra.mxu0 %v1947
    %2255 = vmatprep.mubr.bf16.mxu0 %v1348
    %2256 = vmatmul.mubr.bf16.gmra.mrb[0].mxu0 %v1347
    %v2257 = vpop.f32.mrb[0].mxu0
    %v2258 = vadd.f32 %v1492, %v2257
    %v2259 = vpop.f32.mrb[0].mxu0
    %v2260 = vadd.f32 %v1496, %v2259
    %v2261 = vpop.f32.mrb[0].mxu0
    %v2262 = vpop.f32.mrb[0].mxu0
    %2263 = vdwg.mxu0
    %2264 = vmatprep.subr.bf16.mxu0 %v1952
    %2265 = vmatpush1.bf16.msra.mxu0 %v1951
    %2266 = vmatprep.subr.bf16.mxu0 %v1956
    %2267 = vmatpush1.bf16.msra.mxu0 %v1955
    %2268 = vmatprep.subr.bf16.mxu0 %v1960
    %2269 = vmatpush1.bf16.msra.mxu0 %v1959
    %2270 = vmatprep.subr.bf16.mxu0 %v1964
    %2271 = vmatpush1.bf16.msra.mxu0 %v1963
    %2272 = vmatprep.subr.bf16.mxu0 %v1968
    %2273 = vmatpush1.bf16.msra.mxu0 %v1967
    %2274 = vmatprep.subr.bf16.mxu0 %v1972
    %2275 = vmatpush1.bf16.msra.mxu0 %v1971
    %2276 = vmatprep.subr.bf16.mxu0 %v1976
    %2277 = vmatpush1.bf16.msra.mxu0 %v1975
    %2278 = vmatprep.subr.bf16.mxu0 %v1980
    %2279 = vmatpush1.bf16.msra.mxu0 %v1979
    %2280 = vmatprep.subr.bf16.mxu0 %v1984
    %2281 = vmatpush1.bf16.msra.mxu0 %v1983
    %2282 = vmatprep.subr.bf16.mxu0 %v1988
    %2283 = vmatpush1.bf16.msra.mxu0 %v1987
    %2284 = vmatprep.subr.bf16.mxu0 %v1992
    %2285 = vmatpush1.bf16.msra.mxu0 %v1991
    %2286 = vmatprep.subr.bf16.mxu0 %v1996
    %2287 = vmatpush1.bf16.msra.mxu0 %v1995
    %2288 = vmatprep.subr.bf16.mxu0 %v2000
    %2289 = vmatpush1.bf16.msra.mxu0 %v1999
    %2290 = vmatprep.subr.bf16.mxu0 %v2004
    %2291 = vmatpush1.bf16.msra.mxu0 %v2003
    %2292 = vmatprep.subr.bf16.mxu0 %v2008
    %2293 = vmatpush1.bf16.msra.mxu0 %v2007
    %2294 = vmatprep.subr.bf16.mxu0 %v2012
    %2295 = vmatpush1.bf16.msra.mxu0 %v2011
    %2296 = vmatprep.mubr.bf16.mxu0 %v1350
    %2297 = vmatmul.mubr.bf16.gmra.mrb[0].mxu0 %v1349
    %v2298 = vpop.f32.mrb[0].mxu0
    %v2299 = vadd.f32 %v2258, %v2298
    %v2300 = vpop.f32.mrb[0].mxu0
    %v2301 = vadd.f32 %v2260, %v2300
    %v2302 = vpop.f32.mrb[0].mxu0
    %v2303 = vpop.f32.mrb[0].mxu0
    %2304 = vdwg.mxu0
    %v2305 = vmax.f32 %v2217, 0.0
    %v2306 = vmax.f32 %v2219, 0.0
    %v2307 = vmax.f32 %v2299, 0.0
    %v2308 = vmax.f32 %v2301, 0.0
    %v2309 = vpack.c.bf16 %v1343, %v1343
    %v2310 = vpack.c.bf16 %v1344, %v1344
    %v2311 = vpack.c.bf16 %v1345, %v1345
    %v2312 = vpack.c.bf16 %v1346, %v1346
    %v2313 = vpack.c.bf16 %v2305, %v2305
    %v2314 = vpack.c.bf16 %v2306, %v2306
    %v2315 = vpack.c.bf16 %v2307, %v2307
    %v2316 = vpack.c.bf16 %v2308, %v2308
    %v2317 = vld [vmem:[%s8] sm:$0xf]
    %v2318 = vld [vmem:[%s8 + $0x4] sm:$0xf]
    %v2319 = vld [vmem:[%s8 + $0x8] sm:$0xf]
    %v2320 = vld [vmem:[%s8 + $0xc] sm:$0xf]
    %v2321 = vld [vmem:[%s8 + $0x10] sm:$0xf]
    %v2322 = vld [vmem:[%s8 + $0x14] sm:$0xf]
    %v2323 = vld [vmem:[%s8 + $0x18] sm:$0xf]
    %v2324 = vld [vmem:[%s8 + $0x1c] sm:$0xf]
    %v2325 = vld [vmem:[%s8 + $0x20] sm:$0xf]
    %v2326 = vld [vmem:[%s8 + $0x24] sm:$0xf]
    %v2327 = vld [vmem:[%s8 + $0x28] sm:$0xf]
    %v2328 = vld [vmem:[%s8 + $0x2c] sm:$0xf]
    %v2329 = vld [vmem:[%s8 + $0x30] sm:$0xf]
    %v2330 = vld [vmem:[%s8 + $0x34] sm:$0xf]
    %v2331 = vld [vmem:[%s8 + $0x38] sm:$0xf]
    %v2332 = vld [vmem:[%s8 + $0x3c] sm:$0xf]
    %v2333 = vld [vmem:[%s8 + $0x40] sm:$0xf]
    %v2334 = vld [vmem:[%s8 + $0x44] sm:$0xf]
    %v2335 = vld [vmem:[%s8 + $0x48] sm:$0xf]
    %v2336 = vld [vmem:[%s8 + $0x4c] sm:$0xf]
    %v2337 = vld [vmem:[%s8 + $0x50] sm:$0xf]
    %v2338 = vld [vmem:[%s8 + $0x54] sm:$0xf]
    %v2339 = vld [vmem:[%s8 + $0x58] sm:$0xf]
    %v2340 = vld [vmem:[%s8 + $0x5c] sm:$0xf]
    %v2341 = vld [vmem:[%s8 + $0x60] sm:$0xf]
    %v2342 = vld [vmem:[%s8 + $0x64] sm:$0xf]
    %v2343 = vld [vmem:[%s8 + $0x68] sm:$0xf]
    %v2344 = vld [vmem:[%s8 + $0x6c] sm:$0xf]
    %v2345 = vld [vmem:[%s8 + $0x70] sm:$0xf]
    %v2346 = vld [vmem:[%s8 + $0x74] sm:$0xf]
    %v2347 = vld [vmem:[%s8 + $0x78] sm:$0xf]
    %v2348 = vld [vmem:[%s8 + $0x7c] sm:$0xf]
    %v2349 = vld [vmem:[%s8 + $0x80] sm:$0xf]
    %v2350 = vld [vmem:[%s8 + $0x84] sm:$0xf]
    %v2351 = vld [vmem:[%s8 + $0x88] sm:$0xf]
    %v2352 = vld [vmem:[%s8 + $0x8c] sm:$0xf]
    %v2353 = vld [vmem:[%s8 + $0x90] sm:$0xf]
    %v2354 = vld [vmem:[%s8 + $0x94] sm:$0xf]
    %v2355 = vld [vmem:[%s8 + $0x98] sm:$0xf]
    %v2356 = vld [vmem:[%s8 + $0x9c] sm:$0xf]
    %v2357 = vld [vmem:[%s8 + $0xa0] sm:$0xf]
    %v2358 = vld [vmem:[%s8 + $0xa4] sm:$0xf]
    %v2359 = vld [vmem:[%s8 + $0xa8] sm:$0xf]
    %v2360 = vld [vmem:[%s8 + $0xac] sm:$0xf]
    %v2361 = vld [vmem:[%s8 + $0xb0] sm:$0xf]
    %v2362 = vld [vmem:[%s8 + $0xb4] sm:$0xf]
    %v2363 = vld [vmem:[%s8 + $0xb8] sm:$0xf]
    %v2364 = vld [vmem:[%s8 + $0xbc] sm:$0xf]
    %v2365 = vld [vmem:[%s8 + $0xc0] sm:$0xf]
    %v2366 = vld [vmem:[%s8 + $0xc4] sm:$0xf]
    %v2367 = vld [vmem:[%s8 + $0xc8] sm:$0xf]
    %v2368 = vld [vmem:[%s8 + $0xcc] sm:$0xf]
    %v2369 = vld [vmem:[%s8 + $0xd0] sm:$0xf]
    %v2370 = vld [vmem:[%s8 + $0xd4] sm:$0xf]
    %v2371 = vld [vmem:[%s8 + $0xd8] sm:$0xf]
    %v2372 = vld [vmem:[%s8 + $0xdc] sm:$0xf]
    %v2373 = vld [vmem:[%s8 + $0xe0] sm:$0xf]
    %v2374 = vld [vmem:[%s8 + $0xe4] sm:$0xf]
    %v2375 = vld [vmem:[%s8 + $0xe8] sm:$0xf]
    %v2376 = vld [vmem:[%s8 + $0xec] sm:$0xf]
    %v2377 = vld [vmem:[%s8 + $0xf0] sm:$0xf]
    %v2378 = vld [vmem:[%s8 + $0xf4] sm:$0xf]
    %v2379 = vld [vmem:[%s8 + $0xf8] sm:$0xf]
    %v2380 = vld [vmem:[%s8 + $0xfc] sm:$0xf]
    %v2381 = vld [vmem:[%s8 + $0x100] sm:$0xf]
    %v2382 = vld [vmem:[%s8 + $0x104] sm:$0xf]
    %v2383 = vld [vmem:[%s8 + $0x108] sm:$0xf]
    %v2384 = vld [vmem:[%s8 + $0x10c] sm:$0xf]
    %v2385 = vld [vmem:[%s8 + $0x110] sm:$0xf]
    %v2386 = vld [vmem:[%s8 + $0x114] sm:$0xf]
    %v2387 = vld [vmem:[%s8 + $0x118] sm:$0xf]
    %v2388 = vld [vmem:[%s8 + $0x11c] sm:$0xf]
    %v2389 = vld [vmem:[%s8 + $0x120] sm:$0xf]
    %v2390 = vld [vmem:[%s8 + $0x124] sm:$0xf]
    %v2391 = vld [vmem:[%s8 + $0x128] sm:$0xf]
    %v2392 = vld [vmem:[%s8 + $0x12c] sm:$0xf]
    %v2393 = vld [vmem:[%s8 + $0x130] sm:$0xf]
    %v2394 = vld [vmem:[%s8 + $0x134] sm:$0xf]
    %v2395 = vld [vmem:[%s8 + $0x138] sm:$0xf]
    %v2396 = vld [vmem:[%s8 + $0x13c] sm:$0xf]
    %v2397 = vld [vmem:[%s8 + $0x140] sm:$0xf]
    %v2398 = vld [vmem:[%s8 + $0x144] sm:$0xf]
    %v2399 = vld [vmem:[%s8 + $0x148] sm:$0xf]
    %v2400 = vld [vmem:[%s8 + $0x14c] sm:$0xf]
    %v2401 = vld [vmem:[%s8 + $0x150] sm:$0xf]
    %v2402 = vld [vmem:[%s8 + $0x154] sm:$0xf]
    %v2403 = vld [vmem:[%s8 + $0x158] sm:$0xf]
    %v2404 = vld [vmem:[%s8 + $0x15c] sm:$0xf]
    %v2405 = vld [vmem:[%s8 + $0x160] sm:$0xf]
    %v2406 = vld [vmem:[%s8 + $0x164] sm:$0xf]
    %v2407 = vld [vmem:[%s8 + $0x168] sm:$0xf]
    %v2408 = vld [vmem:[%s8 + $0x16c] sm:$0xf]
    %v2409 = vld [vmem:[%s8 + $0x170] sm:$0xf]
    %v2410 = vld [vmem:[%s8 + $0x174] sm:$0xf]
    %v2411 = vld [vmem:[%s8 + $0x178] sm:$0xf]
    %v2412 = vld [vmem:[%s8 + $0x17c] sm:$0xf]
    %v2413 = vld [vmem:[%s8 + $0x180] sm:$0xf]
    %v2414 = vld [vmem:[%s8 + $0x184] sm:$0xf]
    %v2415 = vld [vmem:[%s8 + $0x188] sm:$0xf]
    %v2416 = vld [vmem:[%s8 + $0x18c] sm:$0xf]
    %v2417 = vld [vmem:[%s8 + $0x190] sm:$0xf]
    %v2418 = vld [vmem:[%s8 + $0x194] sm:$0xf]
    %v2419 = vld [vmem:[%s8 + $0x198] sm:$0xf]
    %v2420 = vld [vmem:[%s8 + $0x19c] sm:$0xf]
    %v2421 = vld [vmem:[%s8 + $0x1a0] sm:$0xf]
    %v2422 = vld [vmem:[%s8 + $0x1a4] sm:$0xf]
    %v2423 = vld [vmem:[%s8 + $0x1a8] sm:$0xf]
    %v2424 = vld [vmem:[%s8 + $0x1ac] sm:$0xf]
    %v2425 = vld [vmem:[%s8 + $0x1b0] sm:$0xf]
    %v2426 = vld [vmem:[%s8 + $0x1b4] sm:$0xf]
    %v2427 = vld [vmem:[%s8 + $0x1b8] sm:$0xf]
    %v2428 = vld [vmem:[%s8 + $0x1bc] sm:$0xf]
    %v2429 = vld [vmem:[%s8 + $0x1c0] sm:$0xf]
    %v2430 = vld [vmem:[%s8 + $0x1c4] sm:$0xf]
    %v2431 = vld [vmem:[%s8 + $0x1c8] sm:$0xf]
    %v2432 = vld [vmem:[%s8 + $0x1cc] sm:$0xf]
    %v2433 = vld [vmem:[%s8 + $0x1d0] sm:$0xf]
    %v2434 = vld [vmem:[%s8 + $0x1d4] sm:$0xf]
    %v2435 = vld [vmem:[%s8 + $0x1d8] sm:$0xf]
    %v2436 = vld [vmem:[%s8 + $0x1dc] sm:$0xf]
    %v2437 = vld [vmem:[%s8 + $0x1e0] sm:$0xf]
    %v2438 = vld [vmem:[%s8 + $0x1e4] sm:$0xf]
    %v2439 = vld [vmem:[%s8 + $0x1e8] sm:$0xf]
    %v2440 = vld [vmem:[%s8 + $0x1ec] sm:$0xf]
    %v2441 = vld [vmem:[%s8 + $0x1f0] sm:$0xf]
    %v2442 = vld [vmem:[%s8 + $0x1f4] sm:$0xf]
    %v2443 = vld [vmem:[%s8 + $0x1f8] sm:$0xf]
    %v2444 = vld [vmem:[%s8 + $0x1fc] sm:$0xf]
    %v2445 = vld [vmem:[%s9] sm:$0x1]
    %v2447 = vlaneseq
    %v2448 = vshrl.u32 %v2447, 7
    %v2449 = vsub.s32 0, %v2448
    %v2450 = vrot.slane %v2445, %v2449
    %v2580 = vunpack.c.l.b16 %v2317
    %v2581 = vunpack.c.l.b16 %v2318
    %v2582 = vunpack.c.l.b16 %v2319
    %v2583 = vunpack.c.l.b16 %v2320
    %v2584 = vunpack.c.l.b16 %v2321
    %v2585 = vunpack.c.l.b16 %v2322
    %v2586 = vunpack.c.l.b16 %v2323
    %v2587 = vunpack.c.l.b16 %v2324
    %v2588 = vunpack.c.l.b16 %v2325
    %v2589 = vunpack.c.l.b16 %v2326
    %v2590 = vunpack.c.l.b16 %v2327
    %v2591 = vunpack.c.l.b16 %v2328
    %v2592 = vunpack.c.l.b16 %v2329
    %v2593 = vunpack.c.l.b16 %v2330
    %v2594 = vunpack.c.l.b16 %v2331
    %v2595 = vunpack.c.l.b16 %v2332
    %v2596 = vunpack.c.l.b16 %v2333
    %v2597 = vunpack.c.l.b16 %v2334
    %v2598 = vunpack.c.l.b16 %v2335
    %v2599 = vunpack.c.l.b16 %v2336
    %v2600 = vunpack.c.l.b16 %v2337
    %v2601 = vunpack.c.l.b16 %v2338
    %v2602 = vunpack.c.l.b16 %v2339
    %v2603 = vunpack.c.l.b16 %v2340
    %v2604 = vunpack.c.l.b16 %v2341
    %v2605 = vunpack.c.l.b16 %v2342
    %v2606 = vunpack.c.l.b16 %v2343
    %v2607 = vunpack.c.l.b16 %v2344
    %v2608 = vunpack.c.l.b16 %v2345
    %v2609 = vunpack.c.l.b16 %v2346
    %v2610 = vunpack.c.l.b16 %v2347
    %v2611 = vunpack.c.l.b16 %v2348
    %v2612 = vunpack.c.l.b16 %v2349
    %v2613 = vunpack.c.l.b16 %v2350
    %v2614 = vunpack.c.l.b16 %v2351
    %v2615 = vunpack.c.l.b16 %v2352
    %v2616 = vunpack.c.l.b16 %v2353
    %v2617 = vunpack.c.l.b16 %v2354
    %v2618 = vunpack.c.l.b16 %v2355
    %v2619 = vunpack.c.l.b16 %v2356
    %v2620 = vunpack.c.l.b16 %v2357
    %v2621 = vunpack.c.l.b16 %v2358
    %v2622 = vunpack.c.l.b16 %v2359
    %v2623 = vunpack.c.l.b16 %v2360
    %v2624 = vunpack.c.l.b16 %v2361
    %v2625 = vunpack.c.l.b16 %v2362
    %v2626 = vunpack.c.l.b16 %v2363
    %v2627 = vunpack.c.l.b16 %v2364
    %v2628 = vunpack.c.l.b16 %v2365
    %v2629 = vunpack.c.l.b16 %v2366
    %v2630 = vunpack.c.l.b16 %v2367
    %v2631 = vunpack.c.l.b16 %v2368
    %v2632 = vunpack.c.l.b16 %v2369
    %v2633 = vunpack.c.l.b16 %v2370
    %v2634 = vunpack.c.l.b16 %v2371
    %v2635 = vunpack.c.l.b16 %v2372
    %v2636 = vunpack.c.l.b16 %v2373
    %v2637 = vunpack.c.l.b16 %v2374
    %v2638 = vunpack.c.l.b16 %v2375
    %v2639 = vunpack.c.l.b16 %v2376
    %v2640 = vunpack.c.l.b16 %v2377
    %v2641 = vunpack.c.l.b16 %v2378
    %v2642 = vunpack.c.l.b16 %v2379
    %v2643 = vunpack.c.l.b16 %v2380
    %v2644 = vunpack.c.l.b16 %v2381
    %v2645 = vunpack.c.l.b16 %v2382
    %v2646 = vunpack.c.l.b16 %v2383
    %v2647 = vunpack.c.l.b16 %v2384
    %v2648 = vunpack.c.l.b16 %v2385
    %v2649 = vunpack.c.l.b16 %v2386
    %v2650 = vunpack.c.l.b16 %v2387
    %v2651 = vunpack.c.l.b16 %v2388
    %v2652 = vunpack.c.l.b16 %v2389
    %v2653 = vunpack.c.l.b16 %v2390
    %v2654 = vunpack.c.l.b16 %v2391
    %v2655 = vunpack.c.l.b16 %v2392
    %v2656 = vunpack.c.l.b16 %v2393
    %v2657 = vunpack.c.l.b16 %v2394
    %v2658 = vunpack.c.l.b16 %v2395
    %v2659 = vunpack.c.l.b16 %v2396
    %v2660 = vunpack.c.l.b16 %v2397
    %v2661 = vunpack.c.l.b16 %v2398
    %v2662 = vunpack.c.l.b16 %v2399
    %v2663 = vunpack.c.l.b16 %v2400
    %v2664 = vunpack.c.l.b16 %v2401
    %v2665 = vunpack.c.l.b16 %v2402
    %v2666 = vunpack.c.l.b16 %v2403
    %v2667 = vunpack.c.l.b16 %v2404
    %v2668 = vunpack.c.l.b16 %v2405
    %v2669 = vunpack.c.l.b16 %v2406
    %v2670 = vunpack.c.l.b16 %v2407
    %v2671 = vunpack.c.l.b16 %v2408
    %v2672 = vunpack.c.l.b16 %v2409
    %v2673 = vunpack.c.l.b16 %v2410
    %v2674 = vunpack.c.l.b16 %v2411
    %v2675 = vunpack.c.l.b16 %v2412
    %v2676 = vunpack.c.l.b16 %v2413
    %v2677 = vunpack.c.l.b16 %v2414
    %v2678 = vunpack.c.l.b16 %v2415
    %v2679 = vunpack.c.l.b16 %v2416
    %v2680 = vunpack.c.l.b16 %v2417
    %v2681 = vunpack.c.l.b16 %v2418
    %v2682 = vunpack.c.l.b16 %v2419
    %v2683 = vunpack.c.l.b16 %v2420
    %v2684 = vunpack.c.l.b16 %v2421
    %v2685 = vunpack.c.l.b16 %v2422
    %v2686 = vunpack.c.l.b16 %v2423
    %v2687 = vunpack.c.l.b16 %v2424
    %v2688 = vunpack.c.l.b16 %v2425
    %v2689 = vunpack.c.l.b16 %v2426
    %v2690 = vunpack.c.l.b16 %v2427
    %v2691 = vunpack.c.l.b16 %v2428
    %v2692 = vunpack.c.l.b16 %v2429
    %v2693 = vunpack.c.l.b16 %v2430
    %v2694 = vunpack.c.l.b16 %v2431
    %v2695 = vunpack.c.l.b16 %v2432
    %v2696 = vunpack.c.l.b16 %v2433
    %v2697 = vunpack.c.l.b16 %v2434
    %v2698 = vunpack.c.l.b16 %v2435
    %v2699 = vunpack.c.l.b16 %v2436
    %v2700 = vunpack.c.l.b16 %v2437
    %v2701 = vunpack.c.l.b16 %v2438
    %v2702 = vunpack.c.l.b16 %v2439
    %v2703 = vunpack.c.l.b16 %v2440
    %v2704 = vunpack.c.l.b16 %v2441
    %v2705 = vunpack.c.l.b16 %v2442
    %v2706 = vunpack.c.l.b16 %v2443
    %v2707 = vunpack.c.l.b16 %v2444
    %v2708 = vpack.c.b16 %v2581, %v2580
    %v2709 = vpack.c.b16 %v2583, %v2582
    %v2710 = vpack.c.b16 %v2585, %v2584
    %v2711 = vpack.c.b16 %v2587, %v2586
    %v2712 = vpack.c.b16 %v2589, %v2588
    %v2713 = vpack.c.b16 %v2591, %v2590
    %v2714 = vpack.c.b16 %v2593, %v2592
    %v2715 = vpack.c.b16 %v2595, %v2594
    %v2716 = vpack.c.b16 %v2597, %v2596
    %v2717 = vpack.c.b16 %v2599, %v2598
    %v2718 = vpack.c.b16 %v2601, %v2600
    %v2719 = vpack.c.b16 %v2603, %v2602
    %v2720 = vpack.c.b16 %v2605, %v2604
    %v2721 = vpack.c.b16 %v2607, %v2606
    %v2722 = vpack.c.b16 %v2609, %v2608
    %v2723 = vpack.c.b16 %v2611, %v2610
    %v2724 = vpack.c.b16 %v2613, %v2612
    %v2725 = vpack.c.b16 %v2615, %v2614
    %v2726 = vpack.c.b16 %v2617, %v2616
    %v2727 = vpack.c.b16 %v2619, %v2618
    %v2728 = vpack.c.b16 %v2621, %v2620
    %v2729 = vpack.c.b16 %v2623, %v2622
    %v2730 = vpack.c.b16 %v2625, %v2624
    %v2731 = vpack.c.b16 %v2627, %v2626
    %v2732 = vpack.c.b16 %v2629, %v2628
    %v2733 = vpack.c.b16 %v2631, %v2630
    %v2734 = vpack.c.b16 %v2633, %v2632
    %v2735 = vpack.c.b16 %v2635, %v2634
    %v2736 = vpack.c.b16 %v2637, %v2636
    %v2737 = vpack.c.b16 %v2639, %v2638
    %v2738 = vpack.c.b16 %v2641, %v2640
    %v2739 = vpack.c.b16 %v2643, %v2642
    %v2740 = vpack.c.b16 %v2645, %v2644
    %v2741 = vpack.c.b16 %v2647, %v2646
    %v2742 = vpack.c.b16 %v2649, %v2648
    %v2743 = vpack.c.b16 %v2651, %v2650
    %v2744 = vpack.c.b16 %v2653, %v2652
    %v2745 = vpack.c.b16 %v2655, %v2654
    %v2746 = vpack.c.b16 %v2657, %v2656
    %v2747 = vpack.c.b16 %v2659, %v2658
    %v2748 = vpack.c.b16 %v2661, %v2660
    %v2749 = vpack.c.b16 %v2663, %v2662
    %v2750 = vpack.c.b16 %v2665, %v2664
    %v2751 = vpack.c.b16 %v2667, %v2666
    %v2752 = vpack.c.b16 %v2669, %v2668
    %v2753 = vpack.c.b16 %v2671, %v2670
    %v2754 = vpack.c.b16 %v2673, %v2672
    %v2755 = vpack.c.b16 %v2675, %v2674
    %v2756 = vpack.c.b16 %v2677, %v2676
    %v2757 = vpack.c.b16 %v2679, %v2678
    %v2758 = vpack.c.b16 %v2681, %v2680
    %v2759 = vpack.c.b16 %v2683, %v2682
    %v2760 = vpack.c.b16 %v2685, %v2684
    %v2761 = vpack.c.b16 %v2687, %v2686
    %v2762 = vpack.c.b16 %v2689, %v2688
    %v2763 = vpack.c.b16 %v2691, %v2690
    %v2764 = vpack.c.b16 %v2693, %v2692
    %v2765 = vpack.c.b16 %v2695, %v2694
    %v2766 = vpack.c.b16 %v2697, %v2696
    %v2767 = vpack.c.b16 %v2699, %v2698
    %v2768 = vpack.c.b16 %v2701, %v2700
    %v2769 = vpack.c.b16 %v2703, %v2702
    %v2770 = vpack.c.b16 %v2705, %v2704
    %v2771 = vpack.c.b16 %v2707, %v2706
    %2836 = vmatprep.subr.bf16.mxu0 0
    %2837 = vmatpush1.bf16.msra.mxu0 %v2708
    %2838 = vmatprep.subr.bf16.mxu0 0
    %2839 = vmatpush1.bf16.msra.mxu0 %v2709
    %2840 = vmatprep.subr.bf16.mxu0 0
    %2841 = vmatpush1.bf16.msra.mxu0 %v2710
    %2842 = vmatprep.subr.bf16.mxu0 0
    %2843 = vmatpush1.bf16.msra.mxu0 %v2711
    %2844 = vmatprep.subr.bf16.mxu0 0
    %2845 = vmatpush1.bf16.msra.mxu0 %v2712
    %2846 = vmatprep.subr.bf16.mxu0 0
    %2847 = vmatpush1.bf16.msra.mxu0 %v2713
    %2848 = vmatprep.subr.bf16.mxu0 0
    %2849 = vmatpush1.bf16.msra.mxu0 %v2714
    %2850 = vmatprep.subr.bf16.mxu0 0
    %2851 = vmatpush1.bf16.msra.mxu0 %v2715
    %2852 = vmatprep.subr.bf16.mxu0 0
    %2853 = vmatpush1.bf16.msra.mxu0 %v2716
    %2854 = vmatprep.subr.bf16.mxu0 0
    %2855 = vmatpush1.bf16.msra.mxu0 %v2717
    %2856 = vmatprep.subr.bf16.mxu0 0
    %2857 = vmatpush1.bf16.msra.mxu0 %v2718
    %2858 = vmatprep.subr.bf16.mxu0 0
    %2859 = vmatpush1.bf16.msra.mxu0 %v2719
    %2860 = vmatprep.subr.bf16.mxu0 0
    %2861 = vmatpush1.bf16.msra.mxu0 %v2720
    %2862 = vmatprep.subr.bf16.mxu0 0
    %2863 = vmatpush1.bf16.msra.mxu0 %v2721
    %2864 = vmatprep.subr.bf16.mxu0 0
    %2865 = vmatpush1.bf16.msra.mxu0 %v2722
    %2866 = vmatprep.subr.bf16.mxu0 0
    %2867 = vmatpush1.bf16.msra.mxu0 %v2723
    %2868 = vmatprep.mubr.bf16.mxu0 %v2310
    %2869 = vmatmul.mubr.bf16.gmra.mrb[0].mxu0 %v2309
    %v2870 = vpop.f32.mrb[0].mxu0
    %v2871 = vadd.f32 %v2450, %v2870
    %v2872 = vpop.f32.mrb[0].mxu0
    %v2873 = vpop.f32.mrb[0].mxu0
    %v2874 = vpop.f32.mrb[0].mxu0
    %2875 = vdwg.mxu0
    %2876 = vmatprep.subr.bf16.mxu0 0
    %2877 = vmatpush1.bf16.msra.mxu0 %v2724
    %2878 = vmatprep.subr.bf16.mxu0 0
    %2879 = vmatpush1.bf16.msra.mxu0 %v2725
    %2880 = vmatprep.subr.bf16.mxu0 0
    %2881 = vmatpush1.bf16.msra.mxu0 %v2726
    %2882 = vmatprep.subr.bf16.mxu0 0
    %2883 = vmatpush1.bf16.msra.mxu0 %v2727
    %2884 = vmatprep.subr.bf16.mxu0 0
    %2885 = vmatpush1.bf16.msra.mxu0 %v2728
    %2886 = vmatprep.subr.bf16.mxu0 0
    %2887 = vmatpush1.bf16.msra.mxu0 %v2729
    %2888 = vmatprep.subr.bf16.mxu0 0
    %2889 = vmatpush1.bf16.msra.mxu0 %v2730
    %2890 = vmatprep.subr.bf16.mxu0 0
    %2891 = vmatpush1.bf16.msra.mxu0 %v2731
    %2892 = vmatprep.subr.bf16.mxu0 0
    %2893 = vmatpush1.bf16.msra.mxu0 %v2732
    %2894 = vmatprep.subr.bf16.mxu0 0
    %2895 = vmatpush1.bf16.msra.mxu0 %v2733
    %2896 = vmatprep.subr.bf16.mxu0 0
    %2897 = vmatpush1.bf16.msra.mxu0 %v2734
    %2898 = vmatprep.subr.bf16.mxu0 0
    %2899 = vmatpush1.bf16.msra.mxu0 %v2735
    %2900 = vmatprep.subr.bf16.mxu0 0
    %2901 = vmatpush1.bf16.msra.mxu0 %v2736
    %2902 = vmatprep.subr.bf16.mxu0 0
    %2903 = vmatpush1.bf16.msra.mxu0 %v2737
    %2904 = vmatprep.subr.bf16.mxu0 0
    %2905 = vmatpush1.bf16.msra.mxu0 %v2738
    %2906 = vmatprep.subr.bf16.mxu0 0
    %2907 = vmatpush1.bf16.msra.mxu0 %v2739
    %2908 = vmatprep.mubr.bf16.mxu0 %v2312
    %2909 = vmatmul.mubr.bf16.gmra.mrb[0].mxu0 %v2311
    %v2910 = vpop.f32.mrb[0].mxu0
    %v2911 = vadd.f32 %v2871, %v2910
    %v2912 = vpop.f32.mrb[0].mxu0
    %v2913 = vpop.f32.mrb[0].mxu0
    %v2914 = vpop.f32.mrb[0].mxu0
    %2915 = vdwg.mxu0
    %2916 = vmatprep.subr.bf16.mxu0 0
    %2917 = vmatpush1.bf16.msra.mxu0 %v2740
    %2918 = vmatprep.subr.bf16.mxu0 0
    %2919 = vmatpush1.bf16.msra.mxu0 %v2741
    %2920 = vmatprep.subr.bf16.mxu0 0
    %2921 = vmatpush1.bf16.msra.mxu0 %v2742
    %2922 = vmatprep.subr.bf16.mxu0 0
    %2923 = vmatpush1.bf16.msra.mxu0 %v2743
    %2924 = vmatprep.subr.bf16.mxu0 0
    %2925 = vmatpush1.bf16.msra.mxu0 %v2744
    %2926 = vmatprep.subr.bf16.mxu0 0
    %2927 = vmatpush1.bf16.msra.mxu0 %v2745
    %2928 = vmatprep.subr.bf16.mxu0 0
    %2929 = vmatpush1.bf16.msra.mxu0 %v2746
    %2930 = vmatprep.subr.bf16.mxu0 0
    %2931 = vmatpush1.bf16.msra.mxu0 %v2747
    %2932 = vmatprep.subr.bf16.mxu0 0
    %2933 = vmatpush1.bf16.msra.mxu0 %v2748
    %2934 = vmatprep.subr.bf16.mxu0 0
    %2935 = vmatpush1.bf16.msra.mxu0 %v2749
    %2936 = vmatprep.subr.bf16.mxu0 0
    %2937 = vmatpush1.bf16.msra.mxu0 %v2750
    %2938 = vmatprep.subr.bf16.mxu0 0
    %2939 = vmatpush1.bf16.msra.mxu0 %v2751
    %2940 = vmatprep.subr.bf16.mxu0 0
    %2941 = vmatpush1.bf16.msra.mxu0 %v2752
    %2942 = vmatprep.subr.bf16.mxu0 0
    %2943 = vmatpush1.bf16.msra.mxu0 %v2753
    %2944 = vmatprep.subr.bf16.mxu0 0
    %2945 = vmatpush1.bf16.msra.mxu0 %v2754
    %2946 = vmatprep.subr.bf16.mxu0 0
    %2947 = vmatpush1.bf16.msra.mxu0 %v2755
    %2948 = vmatprep.mubr.bf16.mxu0 %v2314
    %2949 = vmatmul.mubr.bf16.gmra.mrb[0].mxu0 %v2313
    %v2950 = vpop.f32.mrb[0].mxu0
    %v2951 = vadd.f32 %v2911, %v2950
    %v2952 = vpop.f32.mrb[0].mxu0
    %v2953 = vpop.f32.mrb[0].mxu0
    %v2954 = vpop.f32.mrb[0].mxu0
    %2955 = vdwg.mxu0
    %2956 = vmatprep.subr.bf16.mxu0 0
    %2957 = vmatpush1.bf16.msra.mxu0 %v2756
    %2958 = vmatprep.subr.bf16.mxu0 0
    %2959 = vmatpush1.bf16.msra.mxu0 %v2757
    %2960 = vmatprep.subr.bf16.mxu0 0
    %2961 = vmatpush1.bf16.msra.mxu0 %v2758
    %2962 = vmatprep.subr.bf16.mxu0 0
    %2963 = vmatpush1.bf16.msra.mxu0 %v2759
    %2964 = vmatprep.subr.bf16.mxu0 0
    %2965 = vmatpush1.bf16.msra.mxu0 %v2760
    %2966 = vmatprep.subr.bf16.mxu0 0
    %2967 = vmatpush1.bf16.msra.mxu0 %v2761
    %2968 = vmatprep.subr.bf16.mxu0 0
    %2969 = vmatpush1.bf16.msra.mxu0 %v2762
    %2970 = vmatprep.subr.bf16.mxu0 0
    %2971 = vmatpush1.bf16.msra.mxu0 %v2763
    %2972 = vmatprep.subr.bf16.mxu0 0
    %2973 = vmatpush1.bf16.msra.mxu0 %v2764
    %2974 = vmatprep.subr.bf16.mxu0 0
    %2975 = vmatpush1.bf16.msra.mxu0 %v2765
    %2976 = vmatprep.subr.bf16.mxu0 0
    %2977 = vmatpush1.bf16.msra.mxu0 %v2766
    %2978 = vmatprep.subr.bf16.mxu0 0
    %2979 = vmatpush1.bf16.msra.mxu0 %v2767
    %2980 = vmatprep.subr.bf16.mxu0 0
    %2981 = vmatpush1.bf16.msra.mxu0 %v2768
    %2982 = vmatprep.subr.bf16.mxu0 0
    %2983 = vmatpush1.bf16.msra.mxu0 %v2769
    %2984 = vmatprep.subr.bf16.mxu0 0
    %2985 = vmatpush1.bf16.msra.mxu0 %v2770
    %2986 = vmatprep.subr.bf16.mxu0 0
    %2987 = vmatpush1.bf16.msra.mxu0 %v2771
    %2988 = vmatprep.mubr.bf16.mxu0 %v2316
    %2989 = vmatmul.mubr.bf16.gmra.mrb[0].mxu0 %v2315
    %v2990 = vpop.f32.mrb[0].mxu0
    %v2991 = vadd.f32 %v2951, %v2990
    %v2992 = vpop.f32.mrb[0].mxu0
    %v2993 = vpop.f32.mrb[0].mxu0
    %v2994 = vpop.f32.mrb[0].mxu0
    %2995 = vdwg.mxu0
    %v2996 = vtanh.pop %v2991
    %v2997 = vmul.f32 %v2996, 11.0
    %v2998 = vadd.f32 %v2997, -9.0
    %v2999 = vmul.f32 %v2998, 1.442695
    %v3000 = vpow.pop %v2999
    %v3001 = vld [vmem:[%s1] sm:$0xff]
    %3003 = vrot.lane.b32.xlu0 %v3001, 8
    %v3004 = vpop.permute.xlu0 %3003
    %v3006 = vmul.f32 %v3000, %v3004
    %3008 = vrot.lane.b32.xlu0 %v3006, 120
    %v3009 = vpop.permute.xlu0 %3008
    %v3011 = vadd.f32 %v2991, %v3009
    %v3012 = vtanh.pop %v3011
    %v3013 = vmul.f32 %v3001, -0.5
    %v3014 = vmul.f32 %v3013, %v3001
    %3016 = vrot.lane.b32.xlu0 %v2998, 120
    %v3017 = vpop.permute.xlu0 %3016
    %v3019 = vsub.f32 %v3014, %v3017
    %v3020 = vsub.f32 %v3019, 0.9189385
    %v3021 = vmul.f32 %v3012, %v3012
    %v3022 = vsub.f32 1.0, %v3021
    %v3023 = vadd.f32 %v3022, 1e-07
    %v3024 = vlog2.pop %v3023
    %v3025 = vmul.f32 %v3024, 0.6931472
    %v3026 = vsub.f32 %v3020, %v3025
    %vm3027 = vcmask 64512
    %3028 = vst.msk [vmem:[#allocation7] sm:$0xff] %vm3027, %v3012
    %v3029 = vsel %vm3027, %v3026, 0.0
    %3030 = vadd.xlane.f32.xlu0 %v3029
    %v3031 = vpop.xlane.xlu0 %3030
    %vm3032 = vcmask 7168
    %3033 = vst.msk [vmem:[%s11] sm:$0xff] %vm3032, %v3031
    %3034 = vst.msk [vmem:[#allocation8] sm:$0xff] %vm3027, %v2996
    // Predicated region
    $region50: #{tpu_custom_call.1} parent=1 // pred_check
      _
    $region51: #{tpu_custom_call.1} parent=1 // pred_check_branch
      %3036 = sbr.rel (0) target = $region53
    $region52: #{tpu_custom_call.1} parent=1 // pred_region
      %s3038 = ssub.s32 128, 128
      %3039 = vsyncadd [#allocation4], %s3038
      %s3041 = sshll.u32 [#allocation7], 4
      %s3042 = int_to_ptr.vmem [resolvable:$true] %s3041
      %3044 = dma.vmem_to_hbm [thread:$0]  %s3042, 128, %s10, [#allocation4]
    $region53: #{tpu_custom_call.1} parent=1 // pred_fallthru
      _
    // Predicated region
    $region54: #{tpu_custom_call.1} parent=1 // pred_check
      _
    $region55: #{tpu_custom_call.1} parent=1 // pred_check_branch
      %3046 = sbr.rel (0) target = $region57
    $region56: #{tpu_custom_call.1} parent=1 // pred_region
      _
    $region57: #{tpu_custom_call.1} parent=1 // pred_fallthru
      _
    // Predicated region
    $region58: #{tpu_custom_call.1} parent=1 // pred_check
      _
    $region59: #{tpu_custom_call.1} parent=1 // pred_check_branch
      %3048 = sbr.rel (0) target = $region61
    $region60: #{tpu_custom_call.1} parent=1 // pred_region
      %s3050 = ssub.s32 128, 128
      %3051 = vsyncadd [#allocation9], %s3050
      %s3053 = sshll.u32 [#allocation8], 4
      %s3054 = int_to_ptr.vmem [resolvable:$true] %s3053
      %3056 = dma.vmem_to_hbm [thread:$0]  %s3054, 128, %s12, [#allocation9]
    $region61: #{tpu_custom_call.1} parent=1 // pred_fallthru
      _
    // Predicated region
    $region62: #{tpu_custom_call.1} parent=1 // pred_check
      _
    $region63: #{tpu_custom_call.1} parent=1 // pred_check_branch
      %3058 = sbr.rel (0) target = $region65
    $region64: #{tpu_custom_call.1} parent=1 // pred_region
      %3059 = dma.done [#allocation4], 128
    $region65: #{tpu_custom_call.1} parent=1 // pred_fallthru
      _
    // Predicated region
    $region66: #{tpu_custom_call.1} parent=1 // pred_check
      _
    $region67: #{tpu_custom_call.1} parent=1 // pred_check_branch
      %3061 = sbr.rel (0) target = $region69
    $region68: #{tpu_custom_call.1} parent=1 // pred_region
      _
    $region69: #{tpu_custom_call.1} parent=1 // pred_fallthru
      _
    // Predicated region
    $region70: #{tpu_custom_call.1} parent=1 // pred_check
      _
    $region71: #{tpu_custom_call.1} parent=1 // pred_check_branch
      %3063 = sbr.rel (0) target = $region73
    $region72: #{tpu_custom_call.1} parent=1 // pred_region
      %3064 = dma.done [#allocation9], 128
    $region73: #{tpu_custom_call.1} parent=1 // pred_fallthru
      _
    %3065 = vsyncpa [#allocation3], 1
    %3066 = vsyncpa [#allocation6], 1
    %3067 = vsyncpa [#allocation4], 1
    %3068 = vsyncpa [#allocation9], 1

</llo_original>
